<compile_context>
chip_gen: v5e
topology: v5e:2x2
jax: 0.10.0
libtpu: 0.0.40
codegen_flags: <defaults>
</compile_context>

<pallas_src>
import functools

import jax
import jax.numpy as jnp
from jax import lax
from jax.experimental import pallas as pl
from jax.experimental.pallas import tpu as pltpu


def basic_block_kernel(x_ref, w1_ref, o1_ref, w2_ref, o2_ref, out_ref,
                       xpad_ref, midpad_ref, *, B_TILE, H, W, Cin, Cout):
    """B_TILE batch images per grid step, row-stacked for large-M MXU matmuls.

    x_ref     : (B_TILE, H, W*Cin)     f32  input rows, fused (w*c) lane layout
    w1_ref    : (3, W*Cin, W*Cout)     bf16 block-Toeplitz conv1 weights
                                            (*BN1 scale, horiz. padding folded in)
    o1_ref    : (1, W*Cout)            f32  BN1 offset tiled across W
    w2_ref    : (3, W*Cout, W*Cout)    bf16 block-Toeplitz conv2 weights (*BN2 scale)
    o2_ref    : (1, W*Cout)            f32  BN2 offset tiled across W
    out_ref   : (B_TILE, H, W*Cout)    f32
    xpad_ref  : (B_TILE*(H+2), W*Cin)  bf16 scratch: vertically padded, batch-stacked
    midpad_ref: (B_TILE*(H+2), W*Cout) bf16 scratch: same for conv2 input
    """
    HP = H + 2
    M = B_TILE * HP - 2   # stacked matmul rows; inter-image seam rows are junk, discarded

    # ---- stage conv1 input (bf16, cast exactly once). Per image: zero the
    #      1-row top/bottom halo, copy the H interior rows. Horizontal padding
    #      lives in the weights, so rows are raw W*Cin lanes (no column halo,
    #      no lane-masked partial stores). Every scratch row is rewritten each
    #      grid step, so "parallel" grid semantics stay safe.
    for b in range(B_TILE):                                   # static unroll
        r0 = b * HP
        xpad_ref[r0:r0 + 1, :] = jnp.zeros((1, W * Cin), jnp.bfloat16)
        xpad_ref[r0 + H + 1:r0 + H + 2, :] = jnp.zeros((1, W * Cin), jnp.bfloat16)
        xpad_ref[r0 + 1:r0 + H + 1, :] = x_ref[b].astype(jnp.bfloat16)

    # ---- conv1 * BN1-scale: 3 row-shifted bf16 MXU matmuls, f32 accumulate.
    acc1 = jnp.dot(xpad_ref[0:M, :], w1_ref[0],
                   preferred_element_type=jnp.float32)
    for dy in range(1, 3):                                    # static unroll
        acc1 = acc1 + jnp.dot(xpad_ref[dy:dy + M, :], w1_ref[dy],
                              preferred_element_type=jnp.float32)
    mid = jnp.maximum(acc1 + o1_ref[...], 0.0)                # + BN1 offset, ReLU (f32)

    # ---- stage conv2 input (same scheme; only the valid rows of `mid` are staged).
    for b in range(B_TILE):
        r0 = b * HP
        midpad_ref[r0:r0 + 1, :] = jnp.zeros((1, W * Cout), jnp.bfloat16)
        midpad_ref[r0 + H + 1:r0 + H + 2, :] = jnp.zeros((1, W * Cout), jnp.bfloat16)
        midpad_ref[r0 + 1:r0 + H + 1, :] = mid[r0:r0 + H, :].astype(jnp.bfloat16)

    # ---- conv2 * BN2-scale.
    acc2 = jnp.dot(midpad_ref[0:M, :], w2_ref[0],
                   preferred_element_type=jnp.float32)
    for dy in range(1, 3):
        acc2 = acc2 + jnp.dot(midpad_ref[dy:dy + M, :], w2_ref[dy],
                              preferred_element_type=jnp.float32)

    # ---- + BN2 offset + identity residual (f32), ReLU; dense 256-lane stores.
    for b in range(B_TILE):
        r0 = b * HP
        out_ref[b] = jnp.maximum(acc2[r0:r0 + H, :] + o2_ref[...] + x_ref[b], 0.0)


def _block_toeplitz_weights(w_hwio, scale, W):
    """(3,3,Cin,Cout) HWIO weights with per-Cout BN scale folded in ->
    bf16 (3, W*Cin, W*Cout) block-Toeplitz matrices T with the horizontal SAME
    padding folded in (edge blocks clipped), so that in the fused row-major
    (rows, W*C) activation layout
        conv3x3(stride=1, pad=1)[h, :] = sum_dy vpad_rows[h+dy, :] @ T[dy],
    where vpad_rows carries only the vertical 1-row zero halo.
    """
    KH, KW, Cin, Cout = w_hwio.shape
    ws = w_hwio.astype(jnp.float32) * scale.astype(jnp.float32)   # fold BN scale
    t = jnp.zeros((KH, W * Cin, W * Cout), jnp.float32)
    for xo in range(W):                                           # static, wrapper-side
        for kx in range(KW):
            xi = xo + kx - 1                                      # padding = 1
            if 0 <= xi < W:
                t = t.at[:, xi * Cin:(xi + 1) * Cin,
                         xo * Cout:(xo + 1) * Cout].set(ws[:, kx])
    return t.astype(jnp.bfloat16)


def _pick_batch_tile(N, H, target_m=128):
    """Largest divisor of N whose stacked row count B*(H+2) stays within the MXU
    M target, while keeping grid length >= 2 when N >= 2 (v7x megacore can then
    still split grid steps across its 2 TensorCores; no-op on v5e/v6e)."""
    divisors = [b for b in range(1, N + 1) if N % b == 0]
    cand = [b for b in divisors if N // b >= 2] or [N]
    fits = [b for b in cand if b * (H + 2) <= target_m]
    return max(fits) if fits else min(cand)


def basic_block_pallas(x_nhwc, w1_hwio, bn1, w2_hwio, bn2, eps=1e-5):
    """x_nhwc (N,H,W,C) f32; w*_hwio (3,3,Cin,Cout); bn* = (gamma,beta,mean,var)."""
    N, H, W, Cin = x_nhwc.shape
    Cout = w1_hwio.shape[-1]
    assert Cin == Cout, "identity residual requires Cin == Cout (stride=1, no downsample)"

    g1, be1, m1, v1 = bn1
    s1 = g1 / jnp.sqrt(v1 + eps)
    o1 = be1 - m1 * s1
    g2, be2, m2, v2 = bn2
    s2 = g2 / jnp.sqrt(v2 + eps)
    o2 = be2 - m2 * s2

    w1t = _block_toeplitz_weights(w1_hwio, s1, W)     # (3, W*Cin,  W*Cout) bf16
    w2t = _block_toeplitz_weights(w2_hwio, s2, W)     # (3, W*Cout, W*Cout) bf16
    o1t = jnp.tile(o1.astype(jnp.float32), W).reshape(1, W * Cout)
    o2t = jnp.tile(o2.astype(jnp.float32), W).reshape(1, W * Cout)

    # Fused (rows, W*C) layout: a free reshape of NHWC (C is already minor).
    x2d = x_nhwc.astype(jnp.float32).reshape(N, H, W * Cin)

    B_TILE = _pick_batch_tile(N, H)
    grid = (N // B_TILE,)

    kernel = functools.partial(basic_block_kernel,
                               B_TILE=B_TILE, H=H, W=W, Cin=Cin, Cout=Cout)
    out = pl.pallas_call(
        kernel,
        out_shape=jax.ShapeDtypeStruct((N, H, W * Cout), jnp.float32),
        grid_spec=pltpu.PrefetchScalarGridSpec(
            num_scalar_prefetch=0,
            grid=grid,
            in_specs=[
                pl.BlockSpec((B_TILE, H, W * Cin), lambda n: (n, 0, 0)),
                pl.BlockSpec((3, W * Cin, W * Cout), lambda n: (0, 0, 0)),
                pl.BlockSpec((1, W * Cout), lambda n: (0, 0)),
                pl.BlockSpec((3, W * Cout, W * Cout), lambda n: (0, 0, 0)),
                pl.BlockSpec((1, W * Cout), lambda n: (0, 0)),
            ],
            out_specs=pl.BlockSpec((B_TILE, H, W * Cout), lambda n: (n, 0, 0)),
            scratch_shapes=[
                pltpu.VMEM((B_TILE * (H + 2), W * Cin), jnp.bfloat16),
                pltpu.VMEM((B_TILE * (H + 2), W * Cout), jnp.bfloat16),
            ],
        ),
        compiler_params=pltpu.CompilerParams(
            dimension_semantics=("parallel",)),
    )(x2d, w1t, o1t, w2t, o2t)
    return out.reshape(N, H, W, Cout)


def basic_block_reference(x_nhwc, w1_hwio, bn1, w2_hwio, bn2, eps=1e-5):
    """Plain-JAX f32 reference (lax.conv) for validation."""
    def conv(x, w):
        return lax.conv_general_dilated(
            x, w, window_strides=(1, 1), padding="SAME",
            dimension_numbers=("NHWC", "HWIO", "NHWC"),
            precision=lax.Precision.HIGHEST)

    def bn(x, p):
        g, b, m, v = p
        return (x - m) / jnp.sqrt(v + eps) * g + b

    out = jax.nn.relu(bn(conv(x_nhwc, w1_hwio), bn1))
    out = bn(conv(out, w2_hwio), bn2)
    return jax.nn.relu(out + x_nhwc)


if __name__ == "__main__":
    key = jax.random.PRNGKey(0)
    N, C, H, W = 2, 16, 16, 16      # inplanes = planes = 16, stride = 1
    k = jax.random.split(key, 10)

    # PyTorch-style NCHW input, converted to NHWC for the kernel.
    x_nchw = jax.random.normal(k[0], (N, C, H, W), jnp.float32)
    x_nhwc = jnp.transpose(x_nchw, (0, 2, 3, 1))

    # Deterministic synthetic parameters (shapes from BasicBlock.__init__).
    w1 = jax.random.normal(k[1], (3, 3, C, C), jnp.float32) * 0.1   # conv1 (HWIO)
    w2 = jax.random.normal(k[2], (3, 3, C, C), jnp.float32) * 0.1   # conv2 (HWIO)
    bn1 = (jax.random.uniform(k[3], (C,), jnp.float32, 0.5, 1.5),   # gamma
           jax.random.normal(k[4], (C,), jnp.float32) * 0.1,        # beta
           jax.random.normal(k[5], (C,), jnp.float32) * 0.1,        # running_mean
           jax.random.uniform(k[6], (C,), jnp.float32, 0.5, 1.5))   # running_var
    bn2 = (jax.random.uniform(k[7], (C,), jnp.float32, 0.5, 1.5),
           jax.random.normal(k[8], (C,), jnp.float32) * 0.1,
           jax.random.normal(k[9], (C,), jnp.float32) * 0.1,
           jax.random.uniform(k[3], (C,), jnp.float32, 0.5, 1.5))

    out_nhwc = jax.block_until_ready(
        jax.jit(basic_block_pallas)(x_nhwc, w1, bn1, w2, bn2))
    out_nchw = jnp.transpose(out_nhwc, (0, 3, 1, 2))   # back to PyTorch layout

    ref_nhwc = basic_block_reference(x_nhwc, w1, bn1, w2, bn2)
    assert out_nchw.shape == (N, C, H, W)
    # bf16 MXU inputs (with BN scale folded into the bf16 weights) -> compare
    # against the pure-f32 module reference with a bf16-appropriate tolerance.
    assert jnp.allclose(out_nhwc, ref_nhwc, atol=5e-2, rtol=5e-2), (
        "mismatch vs reference: max abs err = %e"
        % float(jnp.max(jnp.abs(out_nhwc - ref_nhwc))))

    print("KERNEL_OK")
</pallas_src>

<mosaic_0001>
module attributes {stable_mosaic.version = 11 : i64} {
  func.func @basic_block_kernel(%arg0: i32, %arg1: memref<1x16x256xf32, #tpu.memory_space<vmem>>, %arg2: memref<3x256x256xbf16, #tpu.memory_space<vmem>>, %arg3: memref<1x256xf32, #tpu.memory_space<vmem>>, %arg4: memref<3x256x256xbf16, #tpu.memory_space<vmem>>, %arg5: memref<1x256xf32, #tpu.memory_space<vmem>>, %arg6: memref<1x16x256xf32, #tpu.memory_space<vmem>>, %arg7: memref<18x256xbf16, #tpu.memory_space<vmem>>, %arg8: memref<18x256xbf16, #tpu.memory_space<vmem>>) attributes {dimension_semantics = [#tpu.dimension_semantics<parallel>], iteration_bounds = array<i64: 2>, scalar_prefetch = 0 : i64, scratch_operands = 2 : i64, tpu.core_type = #tpu.core_type<tc>, window_params = [{transform_indices = @transform_0, window_bounds = array<i64: 1, 16, 256>}, {pipeline_mode = #tpu.pipeline_mode<synchronous>, transform_indices = @transform_1, window_bounds = array<i64: 3, 256, 256>}, {pipeline_mode = #tpu.pipeline_mode<synchronous>, transform_indices = @transform_2, window_bounds = array<i64: 1, 256>}, {pipeline_mode = #tpu.pipeline_mode<synchronous>, transform_indices = @transform_3, window_bounds = array<i64: 3, 256, 256>}, {pipeline_mode = #tpu.pipeline_mode<synchronous>, transform_indices = @transform_4, window_bounds = array<i64: 1, 256>}, {transform_indices = @transform_5, window_bounds = array<i64: 1, 16, 256>}]} {
    %cst = arith.constant 0.000000e+00 : bf16
    %0 = vector.broadcast %cst : bf16 to vector<1x256xbf16>
    %c0 = arith.constant 0 : index
    %c0_0 = arith.constant 0 : index
    %1 = vector.load %arg7[%c0, %c0_0] : memref<18x256xbf16, #tpu.memory_space<vmem>>, vector<1x256xbf16>
    tpu.vector_store %arg7[%c0, %c0_0], %0 {strides = array<i32>} : memref<18x256xbf16, #tpu.memory_space<vmem>>, vector<1x256xbf16>,
    %cst_1 = arith.constant 0.000000e+00 : bf16
    %2 = vector.broadcast %cst_1 : bf16 to vector<1x256xbf16>
    %c17 = arith.constant 17 : index
    %c0_2 = arith.constant 0 : index
    %3 = vector.load %arg7[%c17, %c0_2] : memref<18x256xbf16, #tpu.memory_space<vmem>>, vector<1x256xbf16>
    tpu.vector_store %arg7[%c17, %c0_2], %2 {strides = array<i32>} : memref<18x256xbf16, #tpu.memory_space<vmem>>, vector<1x256xbf16>,
    %c0_3 = arith.constant 0 : index
    %c0_4 = arith.constant 0 : index
    %c0_5 = arith.constant 0 : index
    %4 = vector.load %arg1[%c0_3, %c0_4, %c0_5] : memref<1x16x256xf32, #tpu.memory_space<vmem>>, vector<1x16x256xf32>
    %5 = vector.shape_cast %4 : vector<1x16x256xf32> to vector<16x256xf32>
    %6 = arith.truncf %5 : vector<16x256xf32> to vector<16x256xbf16>
    %c1 = arith.constant 1 : index
    %c0_6 = arith.constant 0 : index
    %7 = vector.load %arg7[%c1, %c0_6] : memref<18x256xbf16, #tpu.memory_space<vmem>>, vector<16x256xbf16>
    tpu.vector_store %arg7[%c1, %c0_6], %6 {strides = array<i32>} : memref<18x256xbf16, #tpu.memory_space<vmem>>, vector<16x256xbf16>,
    %c0_7 = arith.constant 0 : index
    %c0_8 = arith.constant 0 : index
    %8 = vector.load %arg7[%c0_7, %c0_8] : memref<18x256xbf16, #tpu.memory_space<vmem>>, vector<16x256xbf16>
    %c0_9 = arith.constant 0 : index
    %c0_10 = arith.constant 0 : index
    %c0_11 = arith.constant 0 : index
    %9 = vector.load %arg2[%c0_9, %c0_10, %c0_11] : memref<3x256x256xbf16, #tpu.memory_space<vmem>>, vector<1x256x256xbf16>
    %10 = vector.shape_cast %9 : vector<1x256x256xbf16> to vector<256x256xbf16>
    %cst_12 = arith.constant dense<0.000000e+00> : vector<16x256xf32>
    %11 = tpu.matmul %8, %10, %cst_12 {dimension_numbers = #tpu.dot_dimension_numbers<[1], [0], [0], [1], [0, 0, 1, 1], [], []>} : vector<16x256xbf16>, vector<256x256xbf16>, vector<16x256xf32> -> vector<16x256xf32>
    %c1_13 = arith.constant 1 : index
    %c0_14 = arith.constant 0 : index
    %12 = vector.load %arg7[%c1_13, %c0_14] : memref<18x256xbf16, #tpu.memory_space<vmem>>, vector<16x256xbf16>
    %c1_15 = arith.constant 1 : index
    %c0_16 = arith.constant 0 : index
    %c0_17 = arith.constant 0 : index
    %13 = vector.load %arg2[%c1_15, %c0_16, %c0_17] : memref<3x256x256xbf16, #tpu.memory_space<vmem>>, vector<1x256x256xbf16>
    %14 = vector.shape_cast %13 : vector<1x256x256xbf16> to vector<256x256xbf16>
    %cst_18 = arith.constant dense<0.000000e+00> : vector<16x256xf32>
    %15 = tpu.matmul %12, %14, %cst_18 {dimension_numbers = #tpu.dot_dimension_numbers<[1], [0], [0], [1], [0, 0, 1, 1], [], []>} : vector<16x256xbf16>, vector<256x256xbf16>, vector<16x256xf32> -> vector<16x256xf32>
    %16 = arith.addf %11, %15 : vector<16x256xf32>
    %c2 = arith.constant 2 : index
    %c0_19 = arith.constant 0 : index
    %17 = vector.load %arg7[%c2, %c0_19] : memref<18x256xbf16, #tpu.memory_space<vmem>>, vector<16x256xbf16>
    %c2_20 = arith.constant 2 : index
    %c0_21 = arith.constant 0 : index
    %c0_22 = arith.constant 0 : index
    %18 = vector.load %arg2[%c2_20, %c0_21, %c0_22] : memref<3x256x256xbf16, #tpu.memory_space<vmem>>, vector<1x256x256xbf16>
    %19 = vector.shape_cast %18 : vector<1x256x256xbf16> to vector<256x256xbf16>
    %cst_23 = arith.constant dense<0.000000e+00> : vector<16x256xf32>
    %20 = tpu.matmul %17, %19, %cst_23 {dimension_numbers = #tpu.dot_dimension_numbers<[1], [0], [0], [1], [0, 0, 1, 1], [], []>} : vector<16x256xbf16>, vector<256x256xbf16>, vector<16x256xf32> -> vector<16x256xf32>
    %21 = arith.addf %16, %20 : vector<16x256xf32>
    %c0_24 = arith.constant 0 : index
    %c0_25 = arith.constant 0 : index
    %22 = vector.load %arg3[%c0_24, %c0_25] : memref<1x256xf32, #tpu.memory_space<vmem>>, vector<1x256xf32>
    %23 = vector.broadcast %22 : vector<1x256xf32> to vector<16x256xf32>
    %24 = arith.addf %21, %23 : vector<16x256xf32>
    %cst_26 = arith.constant 0.000000e+00 : f32
    %25 = vector.broadcast %cst_26 : f32 to vector<16x256xf32>
    %26 = arith.maximumf %24, %25 : vector<16x256xf32>
    %cst_27 = arith.constant 0.000000e+00 : bf16
    %27 = vector.broadcast %cst_27 : bf16 to vector<1x256xbf16>
    %c0_28 = arith.constant 0 : index
    %c0_29 = arith.constant 0 : index
    %28 = vector.load %arg8[%c0_28, %c0_29] : memref<18x256xbf16, #tpu.memory_space<vmem>>, vector<1x256xbf16>
    tpu.vector_store %arg8[%c0_28, %c0_29], %27 {strides = array<i32>} : memref<18x256xbf16, #tpu.memory_space<vmem>>, vector<1x256xbf16>,
    %cst_30 = arith.constant 0.000000e+00 : bf16
    %29 = vector.broadcast %cst_30 : bf16 to vector<1x256xbf16>
    %c17_31 = arith.constant 17 : index
    %c0_32 = arith.constant 0 : index
    %30 = vector.load %arg8[%c17_31, %c0_32] : memref<18x256xbf16, #tpu.memory_space<vmem>>, vector<1x256xbf16>
    tpu.vector_store %arg8[%c17_31, %c0_32], %29 {strides = array<i32>} : memref<18x256xbf16, #tpu.memory_space<vmem>>, vector<1x256xbf16>,
    %31 = arith.truncf %26 : vector<16x256xf32> to vector<16x256xbf16>
    %c1_33 = arith.constant 1 : index
    %c0_34 = arith.constant 0 : index
    %32 = vector.load %arg8[%c1_33, %c0_34] : memref<18x256xbf16, #tpu.memory_space<vmem>>, vector<16x256xbf16>
    tpu.vector_store %arg8[%c1_33, %c0_34], %31 {strides = array<i32>} : memref<18x256xbf16, #tpu.memory_space<vmem>>, vector<16x256xbf16>,
    %c0_35 = arith.constant 0 : index
    %c0_36 = arith.constant 0 : index
    %33 = vector.load %arg8[%c0_35, %c0_36] : memref<18x256xbf16, #tpu.memory_space<vmem>>, vector<16x256xbf16>
    %c0_37 = arith.constant 0 : index
    %c0_38 = arith.constant 0 : index
    %c0_39 = arith.constant 0 : index
    %34 = vector.load %arg4[%c0_37, %c0_38, %c0_39] : memref<3x256x256xbf16, #tpu.memory_space<vmem>>, vector<1x256x256xbf16>
    %35 = vector.shape_cast %34 : vector<1x256x256xbf16> to vector<256x256xbf16>
    %cst_40 = arith.constant dense<0.000000e+00> : vector<16x256xf32>
    %36 = tpu.matmul %33, %35, %cst_40 {dimension_numbers = #tpu.dot_dimension_numbers<[1], [0], [0], [1], [0, 0, 1, 1], [], []>} : vector<16x256xbf16>, vector<256x256xbf16>, vector<16x256xf32> -> vector<16x256xf32>
    %c1_41 = arith.constant 1 : index
    %c0_42 = arith.constant 0 : index
    %37 = vector.load %arg8[%c1_41, %c0_42] : memref<18x256xbf16, #tpu.memory_space<vmem>>, vector<16x256xbf16>
    %c1_43 = arith.constant 1 : index
    %c0_44 = arith.constant 0 : index
    %c0_45 = arith.constant 0 : index
    %38 = vector.load %arg4[%c1_43, %c0_44, %c0_45] : memref<3x256x256xbf16, #tpu.memory_space<vmem>>, vector<1x256x256xbf16>
    %39 = vector.shape_cast %38 : vector<1x256x256xbf16> to vector<256x256xbf16>
    %cst_46 = arith.constant dense<0.000000e+00> : vector<16x256xf32>
    %40 = tpu.matmul %37, %39, %cst_46 {dimension_numbers = #tpu.dot_dimension_numbers<[1], [0], [0], [1], [0, 0, 1, 1], [], []>} : vector<16x256xbf16>, vector<256x256xbf16>, vector<16x256xf32> -> vector<16x256xf32>
    %41 = arith.addf %36, %40 : vector<16x256xf32>
    %c2_47 = arith.constant 2 : index
    %c0_48 = arith.constant 0 : index
    %42 = vector.load %arg8[%c2_47, %c0_48] : memref<18x256xbf16, #tpu.memory_space<vmem>>, vector<16x256xbf16>
    %c2_49 = arith.constant 2 : index
    %c0_50 = arith.constant 0 : index
    %c0_51 = arith.constant 0 : index
    %43 = vector.load %arg4[%c2_49, %c0_50, %c0_51] : memref<3x256x256xbf16, #tpu.memory_space<vmem>>, vector<1x256x256xbf16>
    %44 = vector.shape_cast %43 : vector<1x256x256xbf16> to vector<256x256xbf16>
    %cst_52 = arith.constant dense<0.000000e+00> : vector<16x256xf32>
    %45 = tpu.matmul %42, %44, %cst_52 {dimension_numbers = #tpu.dot_dimension_numbers<[1], [0], [0], [1], [0, 0, 1, 1], [], []>} : vector<16x256xbf16>, vector<256x256xbf16>, vector<16x256xf32> -> vector<16x256xf32>
    %46 = arith.addf %41, %45 : vector<16x256xf32>
    %c0_53 = arith.constant 0 : index
    %c0_54 = arith.constant 0 : index
    %47 = vector.load %arg5[%c0_53, %c0_54] : memref<1x256xf32, #tpu.memory_space<vmem>>, vector<1x256xf32>
    %48 = vector.broadcast %47 : vector<1x256xf32> to vector<16x256xf32>
    %49 = arith.addf %46, %48 : vector<16x256xf32>
    %c0_55 = arith.constant 0 : index
    %c0_56 = arith.constant 0 : index
    %c0_57 = arith.constant 0 : index
    %50 = vector.load %arg1[%c0_55, %c0_56, %c0_57] : memref<1x16x256xf32, #tpu.memory_space<vmem>>, vector<1x16x256xf32>
    %51 = vector.shape_cast %50 : vector<1x16x256xf32> to vector<16x256xf32>
    %52 = arith.addf %49, %51 : vector<16x256xf32>
    %cst_58 = arith.constant 0.000000e+00 : f32
    %53 = vector.broadcast %cst_58 : f32 to vector<16x256xf32>
    %54 = arith.maximumf %52, %53 : vector<16x256xf32>
    %c0_59 = arith.constant 0 : index
    %c0_60 = arith.constant 0 : index
    %c0_61 = arith.constant 0 : index
    %55 = vector.load %arg6[%c0_59, %c0_60, %c0_61] : memref<1x16x256xf32, #tpu.memory_space<vmem>>, vector<1x16x256xf32>
    %56 = vector.shape_cast %55 : vector<1x16x256xf32> to vector<16x256xf32>
    %57 = vector.shape_cast %54 : vector<16x256xf32> to vector<1x16x256xf32>
    tpu.vector_store %arg6[%c0_59, %c0_60, %c0_61], %57 {strides = array<i32>} : memref<1x16x256xf32, #tpu.memory_space<vmem>>, vector<1x16x256xf32>,
    return
  }
  func.func @transform_0(%arg0: i32) -> (i32, i32, i32) {
    %c0_i32 = arith.constant 0 : i32
    %c0_i32_0 = arith.constant 0 : i32
    %c0_i32_1 = arith.constant 0 : i32
    return %arg0, %c0_i32, %c0_i32_0 : i32, i32, i32
  }
  func.func @transform_1(%arg0: i32) -> (i32, i32, i32) {
    %c0_i32 = arith.constant 0 : i32
    %c0_i32_0 = arith.constant 0 : i32
    %c0_i32_1 = arith.constant 0 : i32
    %c0_i32_2 = arith.constant 0 : i32
    return %c0_i32, %c0_i32_0, %c0_i32_1 : i32, i32, i32
  }
  func.func @transform_2(%arg0: i32) -> (i32, i32) {
    %c0_i32 = arith.constant 0 : i32
    %c0_i32_0 = arith.constant 0 : i32
    %c0_i32_1 = arith.constant 0 : i32
    return %c0_i32, %c0_i32_0 : i32, i32
  }
  func.func @transform_3(%arg0: i32) -> (i32, i32, i32) {
    %c0_i32 = arith.constant 0 : i32
    %c0_i32_0 = arith.constant 0 : i32
    %c0_i32_1 = arith.constant 0 : i32
    %c0_i32_2 = arith.constant 0 : i32
    return %c0_i32, %c0_i32_0, %c0_i32_1 : i32, i32, i32
  }
  func.func @transform_4(%arg0: i32) -> (i32, i32) {
    %c0_i32 = arith.constant 0 : i32
    %c0_i32_0 = arith.constant 0 : i32
    %c0_i32_1 = arith.constant 0 : i32
    return %c0_i32, %c0_i32_0 : i32, i32
  }
  func.func @transform_5(%arg0: i32) -> (i32, i32, i32) {
    %c0_i32 = arith.constant 0 : i32
    %c0_i32_0 = arith.constant 0 : i32
    %c0_i32_1 = arith.constant 0 : i32
    return %arg0, %c0_i32, %c0_i32_0 : i32, i32, i32
  }
}

</mosaic_0001>

<llo_original>
// kernel: tile.13
$region0: #{tile.13}
  #allocation0 [shape = 's32[1]{0}', space=sflag, size = 0x4, scoped, tag = 'scoped memory for tile.13']
  %s0 = inlined_call_operand.vmem [shape: f32[16], index: 0, kind: input, shape index: {}]
  %s1 = inlined_call_operand.vmem [shape: f32[16,16], index: 1, kind: output, shape index: {}]
  // Predicated region
  $region2: #{tile.13} parent=0 // pred_check
    _
  $region3: #{tile.13} parent=0 // pred_check_branch
    %3 = sbr.rel (0) target = $region5
  $region4: #{tile.13} parent=0 // pred_region
    _
  $region5: #{tile.13} parent=0 // pred_fallthru
    _
  %v4 = vld [vmem:[%s0] ss:$0 sm:$0xff]
  %5 = vst [vmem:[%s1] sm:$0xff] %v4
  %s6 = scalar_lea.vmem %s1, 8
  %7 = vst [vmem:[%s6] sm:$0xff] %v4

// kernel: tile.14
$region0: #{tile.14}
  %s0 = inlined_call_operand.vmem [shape: f32[16,16], index: 0, kind: input, shape index: {}]
  %s1 = inlined_call_operand.vmem [shape: f32[1,256], index: 1, kind: output, shape index: {}]
  $region1: #{tile.14} parent=0
    #allocation0 [shape = 'u8[8192]{0}', space=vmem, size = 0x2000, scoped, tag = 'scoped mem for output reshape']
    %s2 = smov 3
    %v3 = vld [vmem:[%s0] ss:$8 sm:%s2]
    %vm4 = vcmask 130048
    %5 = vst.msk [vmem:[#allocation0] ss:$8 sm:$0x3] %vm4, %v3
    %s6 = scalar_lea.vmem %s0, 7
    %s7 = smov 3
    %v8 = vld [vmem:[%s6] ss:$8 sm:%s7]
    %9 = vrot.lane.b32.xlu0 %v8, 112
    %v10 = vpop.permute.xlu0 %9
    %vm11 = vcmask 1048448
    %12 = vst.msk [vmem:[#allocation0] ss:$8 sm:$0x3] %vm11, %v10
    %s13 = scalar_lea.vmem %s0, 6
    %s14 = smov 3
    %v15 = vld [vmem:[%s13] ss:$8 sm:%s14]
    %16 = vrot.lane.b32.xlu0 %v15, 96
    %v17 = vpop.permute.xlu0 %16
    %vm18 = vcmask 917248
    %19 = vst.msk [vmem:[#allocation0] ss:$8 sm:$0x3] %vm18, %v17
    %s20 = scalar_lea.vmem %s0, 5
    %s21 = smov 3
    %v22 = vld [vmem:[%s20] ss:$8 sm:%s21]
    %23 = vrot.lane.b32.xlu0 %v22, 80
    %v24 = vpop.permute.xlu0 %23
    %vm25 = vcmask 786048
    %26 = vst.msk [vmem:[#allocation0] ss:$8 sm:$0x3] %vm25, %v24
    %s27 = scalar_lea.vmem %s0, 4
    %s28 = smov 3
    %v29 = vld [vmem:[%s27] ss:$8 sm:%s28]
    %30 = vrot.lane.b32.xlu0 %v29, 64
    %v31 = vpop.permute.xlu0 %30
    %vm32 = vcmask 654848
    %33 = vst.msk [vmem:[#allocation0] ss:$8 sm:$0x3] %vm32, %v31
    %s34 = scalar_lea.vmem %s0, 3
    %s35 = smov 3
    %v36 = vld [vmem:[%s34] ss:$8 sm:%s35]
    %37 = vrot.lane.b32.xlu0 %v36, 48
    %v38 = vpop.permute.xlu0 %37
    %vm39 = vcmask 523648
    %40 = vst.msk [vmem:[#allocation0] ss:$8 sm:$0x3] %vm39, %v38
    %s41 = scalar_lea.vmem %s0, 2
    %s42 = smov 3
    %v43 = vld [vmem:[%s41] ss:$8 sm:%s42]
    %44 = vrot.lane.b32.xlu0 %v43, 32
    %v45 = vpop.permute.xlu0 %44
    %vm46 = vcmask 392448
    %47 = vst.msk [vmem:[#allocation0] ss:$8 sm:$0x3] %vm46, %v45
    %s48 = scalar_lea.vmem %s0, 1
    %s49 = smov 3
    %v50 = vld [vmem:[%s48] ss:$8 sm:%s49]
    %51 = vrot.lane.b32.xlu0 %v50, 16
    %v52 = vpop.permute.xlu0 %51
    %vm53 = vcmask 261248
    %54 = vst.msk [vmem:[#allocation0] ss:$8 sm:$0x3] %vm53, %v52
    %s56 = ssub.s32 2, 1
    %v57 = vld [vmem:[#allocation0] sm:%s56]
    %s59 = ssub.s32 2, 1
    %60 = vst [vmem:[%s1] sm:%s59] %v57
    %s61 = scalar_lea.vmem [#allocation0], 8
    %v62 = vld [vmem:[%s61] sm:%s56]
    %s64 = ssub.s32 2, 1
    %s65 = scalar_lea.vmem %s1, 1
    %66 = vst [vmem:[%s65] sm:%s64] %v62

// kernel: basic_block_pallas.1
$region0: #{basic_block_pallas.1}
  #allocation0 [shape = 'u32[]', space=smem, size = 0x4, offset = 0x4, fixed_abs, tag = 'smem constant byte address 0x4 - core index']
  #allocation1 [shape = 'u32[72,128]{1,0:T(1,128)}', space=vmem, size = 0x9000, scoped, tag = 'internal scratch']
  #allocation2 [shape = 'bf16[18,256]{1,0:T(8,128)(2,1)}', space=vmem, size = 0x3000, scoped, tag = 'scratch operand']
  #allocation3 [shape = 'bf16[18,256]{1,0:T(8,128)(2,1)}', space=vmem, size = 0x3000, scoped, tag = 'scratch operand']
  %s0 = inlined_call_operand.vmem [shape: f32[2,16,256], index: 0, kind: input, shape index: {}]
  %s1 = inlined_call_operand.vmem [shape: bf16[3,256,256], index: 1, kind: input, shape index: {}]
  %s2 = inlined_call_operand.vmem [shape: f32[1,256], index: 2, kind: input, shape index: {}]
  %s3 = inlined_call_operand.vmem [shape: bf16[3,256,256], index: 3, kind: input, shape index: {}]
  %s4 = inlined_call_operand.vmem [shape: f32[1,256], index: 4, kind: input, shape index: {}]
  %s5 = inlined_call_operand.vmem [shape: f32[2,16,256], index: 5, kind: output, shape index: {}]
  %s6 = sld [smem:[#allocation0]]
  $region53: #{basic_block_pallas.1} parent=0
    _
  %s8 = ssub.s32 1, %s6
  %s9 = scalar_select 0, %s8, %s6
  loop: start=0, step=1, limit=4
  $region2: #{basic_block_pallas.1} parent=0 // loop_pre_header
    _
  $region3: #{basic_block_pallas.1} parent=0 // loop_header
    %s11 = sphi 0, %s15
    %p12 = scmp.ge.s32.totalorder %s11, 4
    %s21 = sphi 0, %s23
    %s24 = sphi 0, %s21
    %s25 = sphi 0, %s24
    %s41 = sphi 0, %s25
    %s45 = sphi 0, %s45
    %s47 = sphi 0, %s45
    %s48 = sphi 0, %s47
    %s62 = sphi 0, %s48
    %s66 = sphi 0, %s66
    %s68 = sphi 0, %s66
    %s69 = sphi 0, %s68
    %s83 = sphi 0, %s69
    %s87 = sphi 0, %s87
    %s89 = sphi 0, %s87
    %s90 = sphi 0, %s89
    %s104 = sphi 0, %s90
    %s108 = sphi 0, %s108
    %s110 = sphi 0, %s108
    %s111 = sphi 0, %s110
    %s125 = sphi 0, %s111
    %s131 = sphi 0, %s133
    %s134 = sphi 0, %s131
    %s135 = sphi 0, %s134
    %s151 = sphi 0, %s135
  $region4: #{basic_block_pallas.1} parent=0 // loop_header_branch
    %14 = sbr.rel (%p12) target = $region8
  $region5: #{basic_block_pallas.1} parent=0 // loop_body
    %s16 = ssub.s32 %s11, 1
    %s17 = ssub.s32 %s11, 2
    %s18 = sadd.s32 %s11, 1
    %s19 = ssub.s32 %s11, %s18
    %p20 = scmp.eq.s32.totalorder %s19, 0
    %s22 = sadd.s32 %s21, 1
    %s23 = scalar_select %p20, %s21, %s22
    %p26 = pneg %p20
    %p27 = scmp.eq.s32.totalorder %s11, 1
    %p28 = por %p26, %p27
    %p29 = scmp.ne.s32.totalorder %s21, %s24
    %p30 = scmp.eq.s32.totalorder %s11, 0
    %p31 = por %p29, %p30
    %p32 = scmp.ne.s32.totalorder %s21, %s24
    %p33 = scmp.eq.s32.totalorder %s16, 1
    %p34 = por %p32, %p33
    %p35 = scmp.ne.s32.totalorder %s24, %s25
    %p36 = scmp.eq.s32.totalorder %s16, 0
    %p37 = por %p35, %p36
    %p38 = scmp.ne.s32.totalorder %s24, %s25
    %p39 = scmp.eq.s32.totalorder %s17, 1
    %p40 = por %p38, %p39
    %p42 = scmp.ne.s32.totalorder %s25, %s41
    %p43 = scmp.eq.s32.totalorder %s17, 0
    %p44 = por %p42, %p43
    %s46 = sadd.s32 %s45, 1
    %p49 = scmp.eq.s32.totalorder %s11, 1
    %p50 = scmp.ne.s32.totalorder %s45, %s47
    %p51 = scmp.eq.s32.totalorder %s11, 0
    %p52 = por %p50, %p51
    %p53 = scmp.ne.s32.totalorder %s45, %s47
    %p54 = scmp.eq.s32.totalorder %s16, 1
    %p55 = por %p53, %p54
    %p56 = scmp.ne.s32.totalorder %s47, %s48
    %p57 = scmp.eq.s32.totalorder %s16, 0
    %p58 = por %p56, %p57
    %p59 = scmp.ne.s32.totalorder %s47, %s48
    %p60 = scmp.eq.s32.totalorder %s17, 1
    %p61 = por %p59, %p60
    %p63 = scmp.ne.s32.totalorder %s48, %s62
    %p64 = scmp.eq.s32.totalorder %s17, 0
    %p65 = por %p63, %p64
    %s67 = sadd.s32 %s66, 1
    %p70 = scmp.eq.s32.totalorder %s11, 1
    %p71 = scmp.ne.s32.totalorder %s66, %s68
    %p72 = scmp.eq.s32.totalorder %s11, 0
    %p73 = por %p71, %p72
    %p74 = scmp.ne.s32.totalorder %s66, %s68
    %p75 = scmp.eq.s32.totalorder %s16, 1
    %p76 = por %p74, %p75
    %p77 = scmp.ne.s32.totalorder %s68, %s69
    %p78 = scmp.eq.s32.totalorder %s16, 0
    %p79 = por %p77, %p78
    %p80 = scmp.ne.s32.totalorder %s68, %s69
    %p81 = scmp.eq.s32.totalorder %s17, 1
    %p82 = por %p80, %p81
    %p84 = scmp.ne.s32.totalorder %s69, %s83
    %p85 = scmp.eq.s32.totalorder %s17, 0
    %p86 = por %p84, %p85
    %s88 = sadd.s32 %s87, 1
    %p91 = scmp.eq.s32.totalorder %s11, 1
    %p92 = scmp.ne.s32.totalorder %s87, %s89
    %p93 = scmp.eq.s32.totalorder %s11, 0
    %p94 = por %p92, %p93
    %p95 = scmp.ne.s32.totalorder %s87, %s89
    %p96 = scmp.eq.s32.totalorder %s16, 1
    %p97 = por %p95, %p96
    %p98 = scmp.ne.s32.totalorder %s89, %s90
    %p99 = scmp.eq.s32.totalorder %s16, 0
    %p100 = por %p98, %p99
    %p101 = scmp.ne.s32.totalorder %s89, %s90
    %p102 = scmp.eq.s32.totalorder %s17, 1
    %p103 = por %p101, %p102
    %p105 = scmp.ne.s32.totalorder %s90, %s104
    %p106 = scmp.eq.s32.totalorder %s17, 0
    %p107 = por %p105, %p106
    %s109 = sadd.s32 %s108, 1
    %p112 = scmp.eq.s32.totalorder %s11, 1
    %p113 = scmp.ne.s32.totalorder %s108, %s110
    %p114 = scmp.eq.s32.totalorder %s11, 0
    %p115 = por %p113, %p114
    %p116 = scmp.ne.s32.totalorder %s108, %s110
    %p117 = scmp.eq.s32.totalorder %s16, 1
    %p118 = por %p116, %p117
    %p119 = scmp.ne.s32.totalorder %s110, %s111
    %p120 = scmp.eq.s32.totalorder %s16, 0
    %p121 = por %p119, %p120
    %p122 = scmp.ne.s32.totalorder %s110, %s111
    %p123 = scmp.eq.s32.totalorder %s17, 1
    %p124 = por %p122, %p123
    %p126 = scmp.ne.s32.totalorder %s111, %s125
    %p127 = scmp.eq.s32.totalorder %s17, 0
    %p128 = por %p126, %p127
    %s129 = ssub.s32 %s11, %s18
    %p130 = scmp.eq.s32.totalorder %s129, 0
    %s132 = sadd.s32 %s131, 1
    %s133 = scalar_select %p130, %s131, %s132
    %p136 = pneg %p130
    %p137 = scmp.eq.s32.totalorder %s11, 1
    %p138 = por %p136, %p137
    %p139 = scmp.ne.s32.totalorder %s131, %s134
    %p140 = scmp.eq.s32.totalorder %s11, 0
    %p141 = por %p139, %p140
    %p142 = scmp.ne.s32.totalorder %s131, %s134
    %p143 = scmp.eq.s32.totalorder %s16, 1
    %p144 = por %p142, %p143
    %p145 = scmp.ne.s32.totalorder %s134, %s135
    %p146 = scmp.eq.s32.totalorder %s16, 0
    %p147 = por %p145, %p146
    %p148 = scmp.ne.s32.totalorder %s134, %s135
    %p149 = scmp.eq.s32.totalorder %s17, 1
    %p150 = por %p148, %p149
    %p152 = scmp.ne.s32.totalorder %s135, %s151
    %p153 = scmp.eq.s32.totalorder %s17, 0
    %p154 = por %p152, %p153
    %p155 = scmp.le.s32.totalorder 1, %s11
    %p156 = scmp.lt.s32.totalorder %s11, 3
    %p157 = pnand %p155, %p156
    %p158 = pneg %p157
    // Predicated region
    $region9: #{basic_block_pallas.1} parent=5 // pred_check
      _
    $region10: #{basic_block_pallas.1} parent=5 // pred_check_branch
      %160 = sbr.rel (%p157) target = $region12
    $region11: #{basic_block_pallas.1} parent=5 // pred_region
      %s161 = ssub.s32 %s11, 1
      // Predicated region
      $region13: #{basic_block_pallas.1} parent=11 // pred_check
        %p162 = pneg %p58
      $region14: #{basic_block_pallas.1} parent=11 // pred_check_branch
        %164 = sbr.rel (%p162) target = $region16
      $region15: #{basic_block_pallas.1} parent=11 // pred_region
        _
      $region16: #{basic_block_pallas.1} parent=11 // pred_fallthru
        _
      // Predicated region
      $region17: #{basic_block_pallas.1} parent=11 // pred_check
        %p165 = pneg %p79
      $region18: #{basic_block_pallas.1} parent=11 // pred_check_branch
        %167 = sbr.rel (%p165) target = $region20
      $region19: #{basic_block_pallas.1} parent=11 // pred_region
        _
      $region20: #{basic_block_pallas.1} parent=11 // pred_fallthru
        _
      // Predicated region
      $region21: #{basic_block_pallas.1} parent=11 // pred_check
        %p168 = pneg %p100
      $region22: #{basic_block_pallas.1} parent=11 // pred_check_branch
        %170 = sbr.rel (%p168) target = $region24
      $region23: #{basic_block_pallas.1} parent=11 // pred_region
        _
      $region24: #{basic_block_pallas.1} parent=11 // pred_fallthru
        _
      // Predicated region
      $region25: #{basic_block_pallas.1} parent=11 // pred_check
        %p171 = pneg %p121
      $region26: #{basic_block_pallas.1} parent=11 // pred_check_branch
        %173 = sbr.rel (%p171) target = $region28
      $region27: #{basic_block_pallas.1} parent=11 // pred_region
        _
      $region28: #{basic_block_pallas.1} parent=11 // pred_fallthru
        _
    $region12: #{basic_block_pallas.1} parent=5 // pred_fallthru
      _
    %p174 = scmp.lt.s32.totalorder %s11, 2
    // Predicated region
    $region29: #{basic_block_pallas.1} parent=5 // pred_check
      %p175 = pneg %p174
    $region30: #{basic_block_pallas.1} parent=5 // pred_check_branch
      %177 = sbr.rel (%p175) target = $region32
    $region31: #{basic_block_pallas.1} parent=5 // pred_region
      // Predicated region
      $region33: #{basic_block_pallas.1} parent=31 // pred_check
        %p178 = pneg %p31
      $region34: #{basic_block_pallas.1} parent=31 // pred_check_branch
        %180 = sbr.rel (%p178) target = $region36
      $region35: #{basic_block_pallas.1} parent=31 // pred_region
        %p181 = scmp.lt.s32.totalorder %s11, 1
        %s182 = scalar_select %p181, %s11, 1
        %s183 = smul.addr %s182, 4
        %s184 = smul.addr %s183, 8
        %s185 = scalar_lea.vmem %s0, %s184
      $region36: #{basic_block_pallas.1} parent=31 // pred_fallthru
        _
    $region32: #{basic_block_pallas.1} parent=5 // pred_fallthru
      _
    %p186 = scmp.le.s32.totalorder 1, %s11
    %p187 = scmp.lt.s32.totalorder %s11, 3
    %p188 = pnand %p186, %p187
    %p189 = pneg %p188
    // Predicated region
    $region37: #{basic_block_pallas.1} parent=5 // pred_check
      _
    $region38: #{basic_block_pallas.1} parent=5 // pred_check_branch
      %191 = sbr.rel (%p188) target = $region40
    $region39: #{basic_block_pallas.1} parent=5 // pred_region
      %s192 = ssub.s32 %s11, 1
      %p193 = scmp.lt.s32.totalorder %s16, 1
      %s194 = scalar_select %p193, %s16, 1
      %s195 = smul.addr %s194, 4
      %s196 = smul.addr %s195, 8
      %s197 = scalar_lea.vmem %s0, %s196
      %p198 = pneg %p37
      %p199 = pneg %p34
      %p200 = pneg %p58
      %p201 = pneg %p55
      %p202 = pneg %p79
      %p203 = pneg %p76
      %p204 = pneg %p100
      %p205 = pneg %p97
      %p206 = pneg %p121
      %p207 = pneg %p118
      %p208 = pneg %p147
      %p209 = pneg %p144
      %p210 = scmp.lt.s32.totalorder %s16, 1
      %s211 = scalar_select %p210, %s16, 1
      %s212 = smul.addr %s211, 4
      %s213 = smul.addr %s212, 8
      %s214 = scalar_lea.vmem %s5, %s213
      %p215 = scmp.lt.s32.totalorder %s16, 1
      %s216 = scalar_select %p215, %s16, 1
      %s217 = smul.addr %s216, 4
      %s218 = smul.addr %s217, 8
      %s219 = scalar_lea.vmem %s0, %s218
      %p220 = scmp.lt.s32.totalorder %s16, 1
      %s221 = scalar_select %p220, %s16, 1
      %s222 = smul.addr %s221, 4
      %s223 = smul.addr %s222, 8
      %s224 = scalar_lea.vmem %s5, %s223
      %vm226 = vcmask 1040384
      %vm227 = vsmask.f32 256
      %vm228 = vmand %vm226, %vm227
      %vm229 = vcmask 1044484
      %vm230 = vsmask.f32 4352
      %vm231 = vmand %vm229, %vm230
      %vm232 = vmor %vm231, %vm228
      %v233 = vld [vmem:[#allocation2] sm:$0x11]
      %v234 = vsel %vm232, 0, %v233
      %235 = vst [vmem:[#allocation2] sm:$0x11] %v234
      %vm236 = vsmask.f32 7938
      %vm237 = vmand %vm226, %vm236
      %vm238 = vsmask.f32 7954
      %vm239 = vmand %vm229, %vm238
      %vm240 = vmor %vm239, %vm237
      %v241 = vld [vmem:[#allocation2 + $0x10] sm:$0x11]
      %v242 = vsel %vm240, 0, %v241
      %243 = vst [vmem:[#allocation2 + $0x10] sm:$0x11] %v242
      %v244 = vld [vmem:[%s219] sm:$0xff]
      %v245 = vld [vmem:[%s219 + $0x8] sm:$0xff]
      %v246 = vld [vmem:[%s219 + $0x10] sm:$0xff]
      %v247 = vld [vmem:[%s219 + $0x18] sm:$0xff]
      %v248 = vpack.c.bf16 %v245, %v244
      %v249 = vpack.c.bf16 %v247, %v246
      %vm250 = vsmask.f32 4368
      %vm251 = vmor %vm227, %vm250
      %v253 = vshrl.u32 %v248, 16
      %v255 = vrot.slane %v253, 7
      %v256 = vshll.u32 %v248, 16
      %v258 = vor.u32 %v255, %v256
      %v259 = vrot.slane %v255, 4
      %v261 = vshrl.u32 %v249, 16
      %v263 = vrot.slane %v261, 7
      %v264 = vshll.u32 %v249, 16
      %v266 = vor.u32 %v263, %v264
      %v267 = vsel %vm251, %v259, %v266
      %v268 = vrot.slane %v263, 4
      %vm272 = vcmask 1043456
      %vm273 = vmand %vm272, %vm236
      %vm274 = vcmask 1047556
      %vm275 = vmand %vm274, %vm238
      %vm276 = vmor %vm275, %vm273
      %v277 = vld [vmem:[#allocation2] sm:$0xff]
      %v278 = vsel %vm276, %v258, %v277
      %279 = vst [vmem:[#allocation2] sm:$0xff] %v278
      %280 = vst [vmem:[#allocation2 + $0x8] sm:$0xff] %v267
      %v281 = vld [vmem:[#allocation2 + $0x10] sm:$0x11]
      %v282 = vsel %vm232, %v268, %v281
      %283 = vst [vmem:[#allocation2 + $0x10] sm:$0x11] %v282
      %v284 = vld [vmem:[#allocation2] sm:$0xff]
      %v285 = vld [vmem:[#allocation2 + $0x8] sm:$0xff]
      %v286 = vld [vmem:[%s1] sm:$0xff]
      %v287 = vld [vmem:[%s1 + $0x8] sm:$0xff]
      %v288 = vld [vmem:[%s1 + $0x10] sm:$0xff]
      %v289 = vld [vmem:[%s1 + $0x18] sm:$0xff]
      %v290 = vld [vmem:[%s1 + $0x20] sm:$0xff]
      %v291 = vld [vmem:[%s1 + $0x28] sm:$0xff]
      %v292 = vld [vmem:[%s1 + $0x30] sm:$0xff]
      %v293 = vld [vmem:[%s1 + $0x38] sm:$0xff]
      %v294 = vld [vmem:[%s1 + $0x40] sm:$0xff]
      %v295 = vld [vmem:[%s1 + $0x48] sm:$0xff]
      %v296 = vld [vmem:[%s1 + $0x50] sm:$0xff]
      %v297 = vld [vmem:[%s1 + $0x58] sm:$0xff]
      %v298 = vld [vmem:[%s1 + $0x60] sm:$0xff]
      %v299 = vld [vmem:[%s1 + $0x68] sm:$0xff]
      %v300 = vld [vmem:[%s1 + $0x70] sm:$0xff]
      %v301 = vld [vmem:[%s1 + $0x78] sm:$0xff]
      %v302 = vld [vmem:[%s1 + $0x80] sm:$0xff]
      %v303 = vld [vmem:[%s1 + $0x88] sm:$0xff]
      %v304 = vld [vmem:[%s1 + $0x90] sm:$0xff]
      %v305 = vld [vmem:[%s1 + $0x98] sm:$0xff]
      %v306 = vld [vmem:[%s1 + $0xa0] sm:$0xff]
      %v307 = vld [vmem:[%s1 + $0xa8] sm:$0xff]
      %v308 = vld [vmem:[%s1 + $0xb0] sm:$0xff]
      %v309 = vld [vmem:[%s1 + $0xb8] sm:$0xff]
      %v310 = vld [vmem:[%s1 + $0xc0] sm:$0xff]
      %v311 = vld [vmem:[%s1 + $0xc8] sm:$0xff]
      %v312 = vld [vmem:[%s1 + $0xd0] sm:$0xff]
      %v313 = vld [vmem:[%s1 + $0xd8] sm:$0xff]
      %v314 = vld [vmem:[%s1 + $0xe0] sm:$0xff]
      %v315 = vld [vmem:[%s1 + $0xe8] sm:$0xff]
      %v316 = vld [vmem:[%s1 + $0xf0] sm:$0xff]
      %v317 = vld [vmem:[%s1 + $0xf8] sm:$0xff]
      %v318 = vld [vmem:[#allocation2 + $0x10] sm:$0x11]
      %s319 = scalar_lea.vmem %s1, 256
      %v320 = vld [vmem:[%s319] sm:$0xff]
      %v321 = vld [vmem:[%s319 + $0x8] sm:$0xff]
      %v322 = vld [vmem:[%s319 + $0x10] sm:$0xff]
      %v323 = vld [vmem:[%s319 + $0x18] sm:$0xff]
      %v324 = vld [vmem:[%s319 + $0x20] sm:$0xff]
      %v325 = vld [vmem:[%s319 + $0x28] sm:$0xff]
      %v326 = vld [vmem:[%s319 + $0x30] sm:$0xff]
      %v327 = vld [vmem:[%s319 + $0x38] sm:$0xff]
      %v328 = vld [vmem:[%s319 + $0x40] sm:$0xff]
      %v329 = vld [vmem:[%s319 + $0x48] sm:$0xff]
      %v330 = vld [vmem:[%s319 + $0x50] sm:$0xff]
      %v331 = vld [vmem:[%s319 + $0x58] sm:$0xff]
      %v332 = vld [vmem:[%s319 + $0x60] sm:$0xff]
      %v333 = vld [vmem:[%s319 + $0x68] sm:$0xff]
      %v334 = vld [vmem:[%s319 + $0x70] sm:$0xff]
      %v335 = vld [vmem:[%s319 + $0x78] sm:$0xff]
      %v336 = vld [vmem:[%s319 + $0x80] sm:$0xff]
      %v337 = vld [vmem:[%s319 + $0x88] sm:$0xff]
      %v338 = vld [vmem:[%s319 + $0x90] sm:$0xff]
      %v339 = vld [vmem:[%s319 + $0x98] sm:$0xff]
      %v340 = vld [vmem:[%s319 + $0xa0] sm:$0xff]
      %v341 = vld [vmem:[%s319 + $0xa8] sm:$0xff]
      %v342 = vld [vmem:[%s319 + $0xb0] sm:$0xff]
      %v343 = vld [vmem:[%s319 + $0xb8] sm:$0xff]
      %v344 = vld [vmem:[%s319 + $0xc0] sm:$0xff]
      %v345 = vld [vmem:[%s319 + $0xc8] sm:$0xff]
      %v346 = vld [vmem:[%s319 + $0xd0] sm:$0xff]
      %v347 = vld [vmem:[%s319 + $0xd8] sm:$0xff]
      %v348 = vld [vmem:[%s319 + $0xe0] sm:$0xff]
      %v349 = vld [vmem:[%s319 + $0xe8] sm:$0xff]
      %v350 = vld [vmem:[%s319 + $0xf0] sm:$0xff]
      %v351 = vld [vmem:[%s319 + $0xf8] sm:$0xff]
      %v355 = vunpack.c.l.b16 %v284
      %v356 = vunpack.c.h.b16 %v284
      %v357 = vunpack.c.l.b16 %v285
      %v358 = vunpack.c.h.b16 %v285
      %v359 = vunpack.c.l.b16 %v318
      %v360 = vunpack.c.h.b16 %v318
      %v361 = vpack.c.b16 %v357, %v355
      %v362 = vpack.c.b16 %v358, %v356
      %v363 = vpack.c.b16 %v359, %v359
      %v364 = vpack.c.b16 %v360, %v360
      %vm365 = vsmask.f32 7424
      %v367 = vshrl.u32 %v361, 16
      %v369 = vshll.u32 %v361, 16
      %v371 = vrot.slane %v369, 1
      %v372 = vor.u32 %v367, %v371
      %v374 = vshll.u32 %v363, 16
      %v376 = vrot.slane %v374, 1
      %v377 = vsel %vm365, %v372, %v376
      %v379 = vshrl.u32 %v362, 16
      %v381 = vshll.u32 %v362, 16
      %v383 = vrot.slane %v381, 1
      %v384 = vor.u32 %v379, %v383
      %v386 = vshll.u32 %v364, 16
      %v388 = vrot.slane %v386, 1
      %v389 = vsel %vm365, %v384, %v388
      %v424 = vunpack.c.l.b16 %v320
      %v425 = vunpack.c.h.b16 %v320
      %v426 = vunpack.c.l.b16 %v321
      %v427 = vunpack.c.h.b16 %v321
      %v428 = vunpack.c.l.b16 %v322
      %v429 = vunpack.c.h.b16 %v322
      %v430 = vunpack.c.l.b16 %v323
      %v431 = vunpack.c.h.b16 %v323
      %v432 = vunpack.c.l.b16 %v324
      %v433 = vunpack.c.h.b16 %v324
      %v434 = vunpack.c.l.b16 %v325
      %v435 = vunpack.c.h.b16 %v325
      %v436 = vunpack.c.l.b16 %v326
      %v437 = vunpack.c.h.b16 %v326
      %v438 = vunpack.c.l.b16 %v327
      %v439 = vunpack.c.h.b16 %v327
      %v440 = vunpack.c.l.b16 %v328
      %v441 = vunpack.c.h.b16 %v328
      %v442 = vunpack.c.l.b16 %v329
      %v443 = vunpack.c.h.b16 %v329
      %v444 = vunpack.c.l.b16 %v330
      %v445 = vunpack.c.h.b16 %v330
      %v446 = vunpack.c.l.b16 %v331
      %v447 = vunpack.c.h.b16 %v331
      %v448 = vunpack.c.l.b16 %v332
      %v449 = vunpack.c.h.b16 %v332
      %v450 = vunpack.c.l.b16 %v333
      %v451 = vunpack.c.h.b16 %v333
      %v452 = vunpack.c.l.b16 %v334
      %v453 = vunpack.c.h.b16 %v334
      %v454 = vunpack.c.l.b16 %v335
      %v455 = vunpack.c.h.b16 %v335
      %v456 = vunpack.c.l.b16 %v336
      %v457 = vunpack.c.h.b16 %v336
      %v458 = vunpack.c.l.b16 %v337
      %v459 = vunpack.c.h.b16 %v337
      %v460 = vunpack.c.l.b16 %v338
      %v461 = vunpack.c.h.b16 %v338
      %v462 = vunpack.c.l.b16 %v339
      %v463 = vunpack.c.h.b16 %v339
      %v464 = vunpack.c.l.b16 %v340
      %v465 = vunpack.c.h.b16 %v340
      %v466 = vunpack.c.l.b16 %v341
      %v467 = vunpack.c.h.b16 %v341
      %v468 = vunpack.c.l.b16 %v342
      %v469 = vunpack.c.h.b16 %v342
      %v470 = vunpack.c.l.b16 %v343
      %v471 = vunpack.c.h.b16 %v343
      %v472 = vunpack.c.l.b16 %v344
      %v473 = vunpack.c.h.b16 %v344
      %v474 = vunpack.c.l.b16 %v345
      %v475 = vunpack.c.h.b16 %v345
      %v476 = vunpack.c.l.b16 %v346
      %v477 = vunpack.c.h.b16 %v346
      %v478 = vunpack.c.l.b16 %v347
      %v479 = vunpack.c.h.b16 %v347
      %v480 = vunpack.c.l.b16 %v348
      %v481 = vunpack.c.h.b16 %v348
      %v482 = vunpack.c.l.b16 %v349
      %v483 = vunpack.c.h.b16 %v349
      %v484 = vunpack.c.l.b16 %v350
      %v485 = vunpack.c.h.b16 %v350
      %v486 = vunpack.c.l.b16 %v351
      %v487 = vunpack.c.h.b16 %v351
      %v488 = vpack.c.b16 %v426, %v424
      %v489 = vpack.c.b16 %v427, %v425
      %v490 = vpack.c.b16 %v430, %v428
      %v491 = vpack.c.b16 %v431, %v429
      %v492 = vpack.c.b16 %v434, %v432
      %v493 = vpack.c.b16 %v435, %v433
      %v494 = vpack.c.b16 %v438, %v436
      %v495 = vpack.c.b16 %v439, %v437
      %v496 = vpack.c.b16 %v442, %v440
      %v497 = vpack.c.b16 %v443, %v441
      %v498 = vpack.c.b16 %v446, %v444
      %v499 = vpack.c.b16 %v447, %v445
      %v500 = vpack.c.b16 %v450, %v448
      %v501 = vpack.c.b16 %v451, %v449
      %v502 = vpack.c.b16 %v454, %v452
      %v503 = vpack.c.b16 %v455, %v453
      %v504 = vpack.c.b16 %v458, %v456
      %v505 = vpack.c.b16 %v459, %v457
      %v506 = vpack.c.b16 %v462, %v460
      %v507 = vpack.c.b16 %v463, %v461
      %v508 = vpack.c.b16 %v466, %v464
      %v509 = vpack.c.b16 %v467, %v465
      %v510 = vpack.c.b16 %v470, %v468
      %v511 = vpack.c.b16 %v471, %v469
      %v512 = vpack.c.b16 %v474, %v472
      %v513 = vpack.c.b16 %v475, %v473
      %v514 = vpack.c.b16 %v478, %v476
      %v515 = vpack.c.b16 %v479, %v477
      %v516 = vpack.c.b16 %v482, %v480
      %v517 = vpack.c.b16 %v483, %v481
      %v518 = vpack.c.b16 %v486, %v484
      %v519 = vpack.c.b16 %v487, %v485
      %552 = vmatpush.bf16.msra.mxu0 %v502
      %553 = vmatpush.bf16.msra.mxu0 %v500
      %554 = vmatpush.bf16.msra.mxu0 %v498
      %555 = vmatpush.bf16.msra.mxu0 %v496
      %556 = vmatpush.bf16.msra.mxu0 %v494
      %557 = vmatpush.bf16.msra.mxu0 %v492
      %558 = vmatpush.bf16.msra.mxu0 %v490
      %559 = vmatpush.bf16.msra.mxu0 %v488
      %560 = vmatmul.bf16.gmra.mxu0 %v377
      %v561 = vpop.f32.mrf.mxu0
      %v562 = vadd.f32 0.0, %v561
      %v563 = vpop.f32.mrf.mxu0
      %v564 = vadd.f32 0.0, %v563
      %565 = vdwg.mxu0
      %566 = vmatpush.bf16.msra.mxu0 %v518
      %567 = vmatpush.bf16.msra.mxu0 %v516
      %568 = vmatpush.bf16.msra.mxu0 %v514
      %569 = vmatpush.bf16.msra.mxu0 %v512
      %570 = vmatpush.bf16.msra.mxu0 %v510
      %571 = vmatpush.bf16.msra.mxu0 %v508
      %572 = vmatpush.bf16.msra.mxu0 %v506
      %573 = vmatpush.bf16.msra.mxu0 %v504
      %574 = vmatmul.bf16.gmra.mxu0 %v389
      %v575 = vpop.f32.mrf.mxu0
      %v576 = vadd.f32 %v562, %v575
      %v577 = vpop.f32.mrf.mxu0
      %v578 = vadd.f32 %v564, %v577
      %579 = vdwg.mxu0
      %580 = vmatpush.bf16.msra.mxu0 %v503
      %581 = vmatpush.bf16.msra.mxu0 %v501
      %582 = vmatpush.bf16.msra.mxu0 %v499
      %583 = vmatpush.bf16.msra.mxu0 %v497
      %584 = vmatpush.bf16.msra.mxu0 %v495
      %585 = vmatpush.bf16.msra.mxu0 %v493
      %586 = vmatpush.bf16.msra.mxu0 %v491
      %587 = vmatpush.bf16.msra.mxu0 %v489
      %588 = vmatmul.bf16.gmra.mxu0 %v377
      %v589 = vpop.f32.mrf.mxu0
      %v590 = vadd.f32 0.0, %v589
      %v591 = vpop.f32.mrf.mxu0
      %v592 = vadd.f32 0.0, %v591
      %593 = vdwg.mxu0
      %594 = vmatpush.bf16.msra.mxu0 %v519
      %595 = vmatpush.bf16.msra.mxu0 %v517
      %596 = vmatpush.bf16.msra.mxu0 %v515
      %597 = vmatpush.bf16.msra.mxu0 %v513
      %598 = vmatpush.bf16.msra.mxu0 %v511
      %599 = vmatpush.bf16.msra.mxu0 %v509
      %600 = vmatpush.bf16.msra.mxu0 %v507
      %601 = vmatpush.bf16.msra.mxu0 %v505
      %602 = vmatmul.bf16.gmra.mxu0 %v389
      %v603 = vpop.f32.mrf.mxu0
      %v604 = vadd.f32 %v590, %v603
      %v605 = vpop.f32.mrf.mxu0
      %v606 = vadd.f32 %v592, %v605
      %607 = vdwg.mxu0
      %v642 = vunpack.c.l.b16 %v286
      %v643 = vunpack.c.h.b16 %v286
      %v644 = vunpack.c.l.b16 %v287
      %v645 = vunpack.c.h.b16 %v287
      %v646 = vunpack.c.l.b16 %v288
      %v647 = vunpack.c.h.b16 %v288
      %v648 = vunpack.c.l.b16 %v289
      %v649 = vunpack.c.h.b16 %v289
      %v650 = vunpack.c.l.b16 %v290
      %v651 = vunpack.c.h.b16 %v290
      %v652 = vunpack.c.l.b16 %v291
      %v653 = vunpack.c.h.b16 %v291
      %v654 = vunpack.c.l.b16 %v292
      %v655 = vunpack.c.h.b16 %v292
      %v656 = vunpack.c.l.b16 %v293
      %v657 = vunpack.c.h.b16 %v293
      %v658 = vunpack.c.l.b16 %v294
      %v659 = vunpack.c.h.b16 %v294
      %v660 = vunpack.c.l.b16 %v295
      %v661 = vunpack.c.h.b16 %v295
      %v662 = vunpack.c.l.b16 %v296
      %v663 = vunpack.c.h.b16 %v296
      %v664 = vunpack.c.l.b16 %v297
      %v665 = vunpack.c.h.b16 %v297
      %v666 = vunpack.c.l.b16 %v298
      %v667 = vunpack.c.h.b16 %v298
      %v668 = vunpack.c.l.b16 %v299
      %v669 = vunpack.c.h.b16 %v299
      %v670 = vunpack.c.l.b16 %v300
      %v671 = vunpack.c.h.b16 %v300
      %v672 = vunpack.c.l.b16 %v301
      %v673 = vunpack.c.h.b16 %v301
      %v674 = vunpack.c.l.b16 %v302
      %v675 = vunpack.c.h.b16 %v302
      %v676 = vunpack.c.l.b16 %v303
      %v677 = vunpack.c.h.b16 %v303
      %v678 = vunpack.c.l.b16 %v304
      %v679 = vunpack.c.h.b16 %v304
      %v680 = vunpack.c.l.b16 %v305
      %v681 = vunpack.c.h.b16 %v305
      %v682 = vunpack.c.l.b16 %v306
      %v683 = vunpack.c.h.b16 %v306
      %v684 = vunpack.c.l.b16 %v307
      %v685 = vunpack.c.h.b16 %v307
      %v686 = vunpack.c.l.b16 %v308
      %v687 = vunpack.c.h.b16 %v308
      %v688 = vunpack.c.l.b16 %v309
      %v689 = vunpack.c.h.b16 %v309
      %v690 = vunpack.c.l.b16 %v310
      %v691 = vunpack.c.h.b16 %v310
      %v692 = vunpack.c.l.b16 %v311
      %v693 = vunpack.c.h.b16 %v311
      %v694 = vunpack.c.l.b16 %v312
      %v695 = vunpack.c.h.b16 %v312
      %v696 = vunpack.c.l.b16 %v313
      %v697 = vunpack.c.h.b16 %v313
      %v698 = vunpack.c.l.b16 %v314
      %v699 = vunpack.c.h.b16 %v314
      %v700 = vunpack.c.l.b16 %v315
      %v701 = vunpack.c.h.b16 %v315
      %v702 = vunpack.c.l.b16 %v316
      %v703 = vunpack.c.h.b16 %v316
      %v704 = vunpack.c.l.b16 %v317
      %v705 = vunpack.c.h.b16 %v317
      %v706 = vpack.c.b16 %v644, %v642
      %v707 = vpack.c.b16 %v645, %v643
      %v708 = vpack.c.b16 %v648, %v646
      %v709 = vpack.c.b16 %v649, %v647
      %v710 = vpack.c.b16 %v652, %v650
      %v711 = vpack.c.b16 %v653, %v651
      %v712 = vpack.c.b16 %v656, %v654
      %v713 = vpack.c.b16 %v657, %v655
      %v714 = vpack.c.b16 %v660, %v658
      %v715 = vpack.c.b16 %v661, %v659
      %v716 = vpack.c.b16 %v664, %v662
      %v717 = vpack.c.b16 %v665, %v663
      %v718 = vpack.c.b16 %v668, %v666
      %v719 = vpack.c.b16 %v669, %v667
      %v720 = vpack.c.b16 %v672, %v670
      %v721 = vpack.c.b16 %v673, %v671
      %v722 = vpack.c.b16 %v676, %v674
      %v723 = vpack.c.b16 %v677, %v675
      %v724 = vpack.c.b16 %v680, %v678
      %v725 = vpack.c.b16 %v681, %v679
      %v726 = vpack.c.b16 %v684, %v682
      %v727 = vpack.c.b16 %v685, %v683
      %v728 = vpack.c.b16 %v688, %v686
      %v729 = vpack.c.b16 %v689, %v687
      %v730 = vpack.c.b16 %v692, %v690
      %v731 = vpack.c.b16 %v693, %v691
      %v732 = vpack.c.b16 %v696, %v694
      %v733 = vpack.c.b16 %v697, %v695
      %v734 = vpack.c.b16 %v700, %v698
      %v735 = vpack.c.b16 %v701, %v699
      %v736 = vpack.c.b16 %v704, %v702
      %v737 = vpack.c.b16 %v705, %v703
      %770 = vmatpush.bf16.msra.mxu0 %v720
      %771 = vmatpush.bf16.msra.mxu0 %v718
      %772 = vmatpush.bf16.msra.mxu0 %v716
      %773 = vmatpush.bf16.msra.mxu0 %v714
      %774 = vmatpush.bf16.msra.mxu0 %v712
      %775 = vmatpush.bf16.msra.mxu0 %v710
      %776 = vmatpush.bf16.msra.mxu0 %v708
      %777 = vmatpush.bf16.msra.mxu0 %v706
      %778 = vmatmul.bf16.gmra.mxu0 %v361
      %v779 = vpop.f32.mrf.mxu0
      %v780 = vadd.f32 %v576, %v779
      %v781 = vpop.f32.mrf.mxu0
      %v782 = vadd.f32 %v578, %v781
      %783 = vdwg.mxu0
      %784 = vmatpush.bf16.msra.mxu0 %v736
      %785 = vmatpush.bf16.msra.mxu0 %v734
      %786 = vmatpush.bf16.msra.mxu0 %v732
      %787 = vmatpush.bf16.msra.mxu0 %v730
      %788 = vmatpush.bf16.msra.mxu0 %v728
      %789 = vmatpush.bf16.msra.mxu0 %v726
      %790 = vmatpush.bf16.msra.mxu0 %v724
      %791 = vmatpush.bf16.msra.mxu0 %v722
      %792 = vmatmul.bf16.gmra.mxu0 %v362
      %v793 = vpop.f32.mrf.mxu0
      %v794 = vadd.f32 %v780, %v793
      %v795 = vpop.f32.mrf.mxu0
      %v796 = vadd.f32 %v782, %v795
      %797 = vdwg.mxu0
      %798 = vmatpush.bf16.msra.mxu0 %v721
      %799 = vmatpush.bf16.msra.mxu0 %v719
      %800 = vmatpush.bf16.msra.mxu0 %v717
      %801 = vmatpush.bf16.msra.mxu0 %v715
      %802 = vmatpush.bf16.msra.mxu0 %v713
      %803 = vmatpush.bf16.msra.mxu0 %v711
      %804 = vmatpush.bf16.msra.mxu0 %v709
      %805 = vmatpush.bf16.msra.mxu0 %v707
      %806 = vmatmul.bf16.gmra.mxu0 %v361
      %v807 = vpop.f32.mrf.mxu0
      %v808 = vadd.f32 %v604, %v807
      %v809 = vpop.f32.mrf.mxu0
      %v810 = vadd.f32 %v606, %v809
      %811 = vdwg.mxu0
      %812 = vmatpush.bf16.msra.mxu0 %v737
      %813 = vmatpush.bf16.msra.mxu0 %v735
      %814 = vmatpush.bf16.msra.mxu0 %v733
      %815 = vmatpush.bf16.msra.mxu0 %v731
      %816 = vmatpush.bf16.msra.mxu0 %v729
      %817 = vmatpush.bf16.msra.mxu0 %v727
      %818 = vmatpush.bf16.msra.mxu0 %v725
      %819 = vmatpush.bf16.msra.mxu0 %v723
      %820 = vmatmul.bf16.gmra.mxu0 %v362
      %v821 = vpop.f32.mrf.mxu0
      %v822 = vadd.f32 %v808, %v821
      %v823 = vpop.f32.mrf.mxu0
      %v824 = vadd.f32 %v810, %v823
      %825 = vdwg.mxu0
      %v826 = vld [vmem:[#allocation2] sm:$0xee]
      %s827 = scalar_lea.vmem %s1, 512
      %v828 = vld [vmem:[%s827] sm:$0xff]
      %v829 = vld [vmem:[%s827 + $0x8] sm:$0xff]
      %v830 = vld [vmem:[%s827 + $0x10] sm:$0xff]
      %v831 = vld [vmem:[%s827 + $0x18] sm:$0xff]
      %v832 = vld [vmem:[%s827 + $0x20] sm:$0xff]
      %v833 = vld [vmem:[%s827 + $0x28] sm:$0xff]
      %v834 = vld [vmem:[%s827 + $0x30] sm:$0xff]
      %v835 = vld [vmem:[%s827 + $0x38] sm:$0xff]
      %v836 = vld [vmem:[%s827 + $0x40] sm:$0xff]
      %v837 = vld [vmem:[%s827 + $0x48] sm:$0xff]
      %v838 = vld [vmem:[%s827 + $0x50] sm:$0xff]
      %v839 = vld [vmem:[%s827 + $0x58] sm:$0xff]
      %v840 = vld [vmem:[%s827 + $0x60] sm:$0xff]
      %v841 = vld [vmem:[%s827 + $0x68] sm:$0xff]
      %v842 = vld [vmem:[%s827 + $0x70] sm:$0xff]
      %v843 = vld [vmem:[%s827 + $0x78] sm:$0xff]
      %v844 = vld [vmem:[%s827 + $0x80] sm:$0xff]
      %v845 = vld [vmem:[%s827 + $0x88] sm:$0xff]
      %v846 = vld [vmem:[%s827 + $0x90] sm:$0xff]
      %v847 = vld [vmem:[%s827 + $0x98] sm:$0xff]
      %v848 = vld [vmem:[%s827 + $0xa0] sm:$0xff]
      %v849 = vld [vmem:[%s827 + $0xa8] sm:$0xff]
      %v850 = vld [vmem:[%s827 + $0xb0] sm:$0xff]
      %v851 = vld [vmem:[%s827 + $0xb8] sm:$0xff]
      %v852 = vld [vmem:[%s827 + $0xc0] sm:$0xff]
      %v853 = vld [vmem:[%s827 + $0xc8] sm:$0xff]
      %v854 = vld [vmem:[%s827 + $0xd0] sm:$0xff]
      %v855 = vld [vmem:[%s827 + $0xd8] sm:$0xff]
      %v856 = vld [vmem:[%s827 + $0xe0] sm:$0xff]
      %v857 = vld [vmem:[%s827 + $0xe8] sm:$0xff]
      %v858 = vld [vmem:[%s827 + $0xf0] sm:$0xff]
      %v859 = vld [vmem:[%s827 + $0xf8] sm:$0xff]
      %v861 = vunpack.c.l.b16 %v826
      %v862 = vunpack.c.h.b16 %v826
      %v863 = vpack.c.b16 %v357, %v861
      %v864 = vpack.c.b16 %v358, %v862
      %vm865 = vcmask 1046528
      %v866 = vrot.slane %v863, 1
      %v867 = vrot.slane %v363, 1
      %v868 = vsel %vm865, %v866, %v867
      %v869 = vrot.slane %v864, 1
      %v870 = vrot.slane %v364, 1
      %v871 = vsel %vm865, %v869, %v870
      %v906 = vunpack.c.l.b16 %v828
      %v907 = vunpack.c.h.b16 %v828
      %v908 = vunpack.c.l.b16 %v829
      %v909 = vunpack.c.h.b16 %v829
      %v910 = vunpack.c.l.b16 %v830
      %v911 = vunpack.c.h.b16 %v830
      %v912 = vunpack.c.l.b16 %v831
      %v913 = vunpack.c.h.b16 %v831
      %v914 = vunpack.c.l.b16 %v832
      %v915 = vunpack.c.h.b16 %v832
      %v916 = vunpack.c.l.b16 %v833
      %v917 = vunpack.c.h.b16 %v833
      %v918 = vunpack.c.l.b16 %v834
      %v919 = vunpack.c.h.b16 %v834
      %v920 = vunpack.c.l.b16 %v835
      %v921 = vunpack.c.h.b16 %v835
      %v922 = vunpack.c.l.b16 %v836
      %v923 = vunpack.c.h.b16 %v836
      %v924 = vunpack.c.l.b16 %v837
      %v925 = vunpack.c.h.b16 %v837
      %v926 = vunpack.c.l.b16 %v838
      %v927 = vunpack.c.h.b16 %v838
      %v928 = vunpack.c.l.b16 %v839
      %v929 = vunpack.c.h.b16 %v839
      %v930 = vunpack.c.l.b16 %v840
      %v931 = vunpack.c.h.b16 %v840
      %v932 = vunpack.c.l.b16 %v841
      %v933 = vunpack.c.h.b16 %v841
      %v934 = vunpack.c.l.b16 %v842
      %v935 = vunpack.c.h.b16 %v842
      %v936 = vunpack.c.l.b16 %v843
      %v937 = vunpack.c.h.b16 %v843
      %v938 = vunpack.c.l.b16 %v844
      %v939 = vunpack.c.h.b16 %v844
      %v940 = vunpack.c.l.b16 %v845
      %v941 = vunpack.c.h.b16 %v845
      %v942 = vunpack.c.l.b16 %v846
      %v943 = vunpack.c.h.b16 %v846
      %v944 = vunpack.c.l.b16 %v847
      %v945 = vunpack.c.h.b16 %v847
      %v946 = vunpack.c.l.b16 %v848
      %v947 = vunpack.c.h.b16 %v848
      %v948 = vunpack.c.l.b16 %v849
      %v949 = vunpack.c.h.b16 %v849
      %v950 = vunpack.c.l.b16 %v850
      %v951 = vunpack.c.h.b16 %v850
      %v952 = vunpack.c.l.b16 %v851
      %v953 = vunpack.c.h.b16 %v851
      %v954 = vunpack.c.l.b16 %v852
      %v955 = vunpack.c.h.b16 %v852
      %v956 = vunpack.c.l.b16 %v853
      %v957 = vunpack.c.h.b16 %v853
      %v958 = vunpack.c.l.b16 %v854
      %v959 = vunpack.c.h.b16 %v854
      %v960 = vunpack.c.l.b16 %v855
      %v961 = vunpack.c.h.b16 %v855
      %v962 = vunpack.c.l.b16 %v856
      %v963 = vunpack.c.h.b16 %v856
      %v964 = vunpack.c.l.b16 %v857
      %v965 = vunpack.c.h.b16 %v857
      %v966 = vunpack.c.l.b16 %v858
      %v967 = vunpack.c.h.b16 %v858
      %v968 = vunpack.c.l.b16 %v859
      %v969 = vunpack.c.h.b16 %v859
      %v970 = vpack.c.b16 %v908, %v906
      %v971 = vpack.c.b16 %v909, %v907
      %v972 = vpack.c.b16 %v912, %v910
      %v973 = vpack.c.b16 %v913, %v911
      %v974 = vpack.c.b16 %v916, %v914
      %v975 = vpack.c.b16 %v917, %v915
      %v976 = vpack.c.b16 %v920, %v918
      %v977 = vpack.c.b16 %v921, %v919
      %v978 = vpack.c.b16 %v924, %v922
      %v979 = vpack.c.b16 %v925, %v923
      %v980 = vpack.c.b16 %v928, %v926
      %v981 = vpack.c.b16 %v929, %v927
      %v982 = vpack.c.b16 %v932, %v930
      %v983 = vpack.c.b16 %v933, %v931
      %v984 = vpack.c.b16 %v936, %v934
      %v985 = vpack.c.b16 %v937, %v935
      %v986 = vpack.c.b16 %v940, %v938
      %v987 = vpack.c.b16 %v941, %v939
      %v988 = vpack.c.b16 %v944, %v942
      %v989 = vpack.c.b16 %v945, %v943
      %v990 = vpack.c.b16 %v948, %v946
      %v991 = vpack.c.b16 %v949, %v947
      %v992 = vpack.c.b16 %v952, %v950
      %v993 = vpack.c.b16 %v953, %v951
      %v994 = vpack.c.b16 %v956, %v954
      %v995 = vpack.c.b16 %v957, %v955
      %v996 = vpack.c.b16 %v960, %v958
      %v997 = vpack.c.b16 %v961, %v959
      %v998 = vpack.c.b16 %v964, %v962
      %v999 = vpack.c.b16 %v965, %v963
      %v1000 = vpack.c.b16 %v968, %v966
      %v1001 = vpack.c.b16 %v969, %v967
      %1034 = vmatpush.bf16.msra.mxu0 %v984
      %1035 = vmatpush.bf16.msra.mxu0 %v982
      %1036 = vmatpush.bf16.msra.mxu0 %v980
      %1037 = vmatpush.bf16.msra.mxu0 %v978
      %1038 = vmatpush.bf16.msra.mxu0 %v976
      %1039 = vmatpush.bf16.msra.mxu0 %v974
      %1040 = vmatpush.bf16.msra.mxu0 %v972
      %1041 = vmatpush.bf16.msra.mxu0 %v970
      %1042 = vmatmul.bf16.gmra.mxu0 %v868
      %v1043 = vpop.f32.mrf.mxu0
      %v1044 = vadd.f32 0.0, %v1043
      %v1045 = vpop.f32.mrf.mxu0
      %v1046 = vadd.f32 0.0, %v1045
      %1047 = vdwg.mxu0
      %1048 = vmatpush.bf16.msra.mxu0 %v1000
      %1049 = vmatpush.bf16.msra.mxu0 %v998
      %1050 = vmatpush.bf16.msra.mxu0 %v996
      %1051 = vmatpush.bf16.msra.mxu0 %v994
      %1052 = vmatpush.bf16.msra.mxu0 %v992
      %1053 = vmatpush.bf16.msra.mxu0 %v990
      %1054 = vmatpush.bf16.msra.mxu0 %v988
      %1055 = vmatpush.bf16.msra.mxu0 %v986
      %1056 = vmatmul.bf16.gmra.mxu0 %v871
      %v1057 = vpop.f32.mrf.mxu0
      %v1058 = vadd.f32 %v1044, %v1057
      %v1059 = vpop.f32.mrf.mxu0
      %v1060 = vadd.f32 %v1046, %v1059
      %1061 = vdwg.mxu0
      %1062 = vmatpush.bf16.msra.mxu0 %v985
      %1063 = vmatpush.bf16.msra.mxu0 %v983
      %1064 = vmatpush.bf16.msra.mxu0 %v981
      %1065 = vmatpush.bf16.msra.mxu0 %v979
      %1066 = vmatpush.bf16.msra.mxu0 %v977
      %1067 = vmatpush.bf16.msra.mxu0 %v975
      %1068 = vmatpush.bf16.msra.mxu0 %v973
      %1069 = vmatpush.bf16.msra.mxu0 %v971
      %1070 = vmatmul.bf16.gmra.mxu0 %v868
      %v1071 = vpop.f32.mrf.mxu0
      %v1072 = vadd.f32 0.0, %v1071
      %v1073 = vpop.f32.mrf.mxu0
      %v1074 = vadd.f32 0.0, %v1073
      %1075 = vdwg.mxu0
      %1076 = vmatpush.bf16.msra.mxu0 %v1001
      %1077 = vmatpush.bf16.msra.mxu0 %v999
      %1078 = vmatpush.bf16.msra.mxu0 %v997
      %1079 = vmatpush.bf16.msra.mxu0 %v995
      %1080 = vmatpush.bf16.msra.mxu0 %v993
      %1081 = vmatpush.bf16.msra.mxu0 %v991
      %1082 = vmatpush.bf16.msra.mxu0 %v989
      %1083 = vmatpush.bf16.msra.mxu0 %v987
      %1084 = vmatmul.bf16.gmra.mxu0 %v871
      %v1085 = vpop.f32.mrf.mxu0
      %v1086 = vadd.f32 %v1072, %v1085
      %v1087 = vpop.f32.mrf.mxu0
      %v1088 = vadd.f32 %v1074, %v1087
      %1089 = vdwg.mxu0
      %v1090 = vadd.f32 %v794, %v1058
      %v1091 = vadd.f32 %v822, %v1086
      %v1092 = vadd.f32 %v796, %v1060
      %v1093 = vadd.f32 %v824, %v1088
      %v1094 = vld [vmem:[%s2] sm:$0x3]
      %v1096 = vperm.slane %v1094, 0
      %v1097 = vperm.slane %v1094, 1
      %v1100 = vadd.f32 %v1090, %v1096
      %v1101 = vadd.f32 %v1091, %v1097
      %v1102 = vadd.f32 %v1092, %v1096
      %v1103 = vadd.f32 %v1093, %v1097
      %v1104 = vmax.f32 %v1100, 0.0
      %v1105 = vmax.f32 %v1101, 0.0
      %v1106 = vmax.f32 %v1102, 0.0
      %v1107 = vmax.f32 %v1103, 0.0
      %v1108 = vld [vmem:[#allocation3] sm:$0x11]
      %v1109 = vsel %vm232, 0, %v1108
      %1110 = vst [vmem:[#allocation3] sm:$0x11] %v1109
      %v1111 = vld [vmem:[#allocation3 + $0x10] sm:$0x11]
      %v1112 = vsel %vm240, 0, %v1111
      %1113 = vst [vmem:[#allocation3 + $0x10] sm:$0x11] %v1112
      %v1114 = vpack.c.bf16 %v1105, %v1104
      %v1115 = vpack.c.bf16 %v1107, %v1106
      %v1117 = vshrl.u32 %v1114, 16
      %v1119 = vrot.slane %v1117, 7
      %v1120 = vshll.u32 %v1114, 16
      %v1122 = vor.u32 %v1119, %v1120
      %v1123 = vrot.slane %v1119, 4
      %v1125 = vshrl.u32 %v1115, 16
      %v1127 = vrot.slane %v1125, 7
      %v1128 = vshll.u32 %v1115, 16
      %v1130 = vor.u32 %v1127, %v1128
      %v1131 = vsel %vm251, %v1123, %v1130
      %v1132 = vrot.slane %v1127, 4
      %v1136 = vld [vmem:[#allocation3] sm:$0xff]
      %v1137 = vsel %vm276, %v1122, %v1136
      %1138 = vst [vmem:[#allocation3] sm:$0xff] %v1137
      %1139 = vst [vmem:[#allocation3 + $0x8] sm:$0xff] %v1131
      %v1140 = vld [vmem:[#allocation3 + $0x10] sm:$0x11]
      %v1141 = vsel %vm232, %v1132, %v1140
      %1142 = vst [vmem:[#allocation3 + $0x10] sm:$0x11] %v1141
      %v1143 = vld [vmem:[#allocation3] sm:$0xff]
      %v1144 = vld [vmem:[#allocation3 + $0x8] sm:$0xff]
      %v1145 = vld [vmem:[%s3] sm:$0xff]
      %v1146 = vld [vmem:[%s3 + $0x8] sm:$0xff]
      %v1147 = vld [vmem:[%s3 + $0x10] sm:$0xff]
      %v1148 = vld [vmem:[%s3 + $0x18] sm:$0xff]
      %v1149 = vld [vmem:[%s3 + $0x20] sm:$0xff]
      %v1150 = vld [vmem:[%s3 + $0x28] sm:$0xff]
      %v1151 = vld [vmem:[%s3 + $0x30] sm:$0xff]
      %v1152 = vld [vmem:[%s3 + $0x38] sm:$0xff]
      %v1153 = vld [vmem:[%s3 + $0x40] sm:$0xff]
      %v1154 = vld [vmem:[%s3 + $0x48] sm:$0xff]
      %v1155 = vld [vmem:[%s3 + $0x50] sm:$0xff]
      %v1156 = vld [vmem:[%s3 + $0x58] sm:$0xff]
      %v1157 = vld [vmem:[%s3 + $0x60] sm:$0xff]
      %v1158 = vld [vmem:[%s3 + $0x68] sm:$0xff]
      %v1159 = vld [vmem:[%s3 + $0x70] sm:$0xff]
      %v1160 = vld [vmem:[%s3 + $0x78] sm:$0xff]
      %v1161 = vld [vmem:[%s3 + $0x80] sm:$0xff]
      %v1162 = vld [vmem:[%s3 + $0x88] sm:$0xff]
      %v1163 = vld [vmem:[%s3 + $0x90] sm:$0xff]
      %v1164 = vld [vmem:[%s3 + $0x98] sm:$0xff]
      %v1165 = vld [vmem:[%s3 + $0xa0] sm:$0xff]
      %v1166 = vld [vmem:[%s3 + $0xa8] sm:$0xff]
      %v1167 = vld [vmem:[%s3 + $0xb0] sm:$0xff]
      %v1168 = vld [vmem:[%s3 + $0xb8] sm:$0xff]
      %v1169 = vld [vmem:[%s3 + $0xc0] sm:$0xff]
      %v1170 = vld [vmem:[%s3 + $0xc8] sm:$0xff]
      %v1171 = vld [vmem:[%s3 + $0xd0] sm:$0xff]
      %v1172 = vld [vmem:[%s3 + $0xd8] sm:$0xff]
      %v1173 = vld [vmem:[%s3 + $0xe0] sm:$0xff]
      %v1174 = vld [vmem:[%s3 + $0xe8] sm:$0xff]
      %v1175 = vld [vmem:[%s3 + $0xf0] sm:$0xff]
      %v1176 = vld [vmem:[%s3 + $0xf8] sm:$0xff]
      %v1177 = vld [vmem:[#allocation3 + $0x10] sm:$0x11]
      %s1178 = scalar_lea.vmem %s3, 256
      %v1179 = vld [vmem:[%s1178] sm:$0xff]
      %v1180 = vld [vmem:[%s1178 + $0x8] sm:$0xff]
      %v1181 = vld [vmem:[%s1178 + $0x10] sm:$0xff]
      %v1182 = vld [vmem:[%s1178 + $0x18] sm:$0xff]
      %v1183 = vld [vmem:[%s1178 + $0x20] sm:$0xff]
      %v1184 = vld [vmem:[%s1178 + $0x28] sm:$0xff]
      %v1185 = vld [vmem:[%s1178 + $0x30] sm:$0xff]
      %v1186 = vld [vmem:[%s1178 + $0x38] sm:$0xff]
      %v1187 = vld [vmem:[%s1178 + $0x40] sm:$0xff]
      %v1188 = vld [vmem:[%s1178 + $0x48] sm:$0xff]
      %v1189 = vld [vmem:[%s1178 + $0x50] sm:$0xff]
      %v1190 = vld [vmem:[%s1178 + $0x58] sm:$0xff]
      %v1191 = vld [vmem:[%s1178 + $0x60] sm:$0xff]
      %v1192 = vld [vmem:[%s1178 + $0x68] sm:$0xff]
      %v1193 = vld [vmem:[%s1178 + $0x70] sm:$0xff]
      %v1194 = vld [vmem:[%s1178 + $0x78] sm:$0xff]
      %v1195 = vld [vmem:[%s1178 + $0x80] sm:$0xff]
      %v1196 = vld [vmem:[%s1178 + $0x88] sm:$0xff]
      %v1197 = vld [vmem:[%s1178 + $0x90] sm:$0xff]
      %v1198 = vld [vmem:[%s1178 + $0x98] sm:$0xff]
      %v1199 = vld [vmem:[%s1178 + $0xa0] sm:$0xff]
      %v1200 = vld [vmem:[%s1178 + $0xa8] sm:$0xff]
      %v1201 = vld [vmem:[%s1178 + $0xb0] sm:$0xff]
      %v1202 = vld [vmem:[%s1178 + $0xb8] sm:$0xff]
      %v1203 = vld [vmem:[%s1178 + $0xc0] sm:$0xff]
      %v1204 = vld [vmem:[%s1178 + $0xc8] sm:$0xff]
      %v1205 = vld [vmem:[%s1178 + $0xd0] sm:$0xff]
      %v1206 = vld [vmem:[%s1178 + $0xd8] sm:$0xff]
      %v1207 = vld [vmem:[%s1178 + $0xe0] sm:$0xff]
      %v1208 = vld [vmem:[%s1178 + $0xe8] sm:$0xff]
      %v1209 = vld [vmem:[%s1178 + $0xf0] sm:$0xff]
      %v1210 = vld [vmem:[%s1178 + $0xf8] sm:$0xff]
      %v1214 = vunpack.c.l.b16 %v1143
      %v1215 = vunpack.c.h.b16 %v1143
      %v1216 = vunpack.c.l.b16 %v1144
      %v1217 = vunpack.c.h.b16 %v1144
      %v1218 = vunpack.c.l.b16 %v1177
      %v1219 = vunpack.c.h.b16 %v1177
      %v1220 = vpack.c.b16 %v1216, %v1214
      %v1221 = vpack.c.b16 %v1217, %v1215
      %v1222 = vpack.c.b16 %v1218, %v1218
      %v1223 = vpack.c.b16 %v1219, %v1219
      %v1225 = vshrl.u32 %v1220, 16
      %v1227 = vshll.u32 %v1220, 16
      %v1229 = vrot.slane %v1227, 1
      %v1230 = vor.u32 %v1225, %v1229
      %v1232 = vshll.u32 %v1222, 16
      %v1234 = vrot.slane %v1232, 1
      %v1235 = vsel %vm365, %v1230, %v1234
      %v1237 = vshrl.u32 %v1221, 16
      %v1239 = vshll.u32 %v1221, 16
      %v1241 = vrot.slane %v1239, 1
      %v1242 = vor.u32 %v1237, %v1241
      %v1244 = vshll.u32 %v1223, 16
      %v1246 = vrot.slane %v1244, 1
      %v1247 = vsel %vm365, %v1242, %v1246
      %v1282 = vunpack.c.l.b16 %v1179
      %v1283 = vunpack.c.h.b16 %v1179
      %v1284 = vunpack.c.l.b16 %v1180
      %v1285 = vunpack.c.h.b16 %v1180
      %v1286 = vunpack.c.l.b16 %v1181
      %v1287 = vunpack.c.h.b16 %v1181
      %v1288 = vunpack.c.l.b16 %v1182
      %v1289 = vunpack.c.h.b16 %v1182
      %v1290 = vunpack.c.l.b16 %v1183
      %v1291 = vunpack.c.h.b16 %v1183
      %v1292 = vunpack.c.l.b16 %v1184
      %v1293 = vunpack.c.h.b16 %v1184
      %v1294 = vunpack.c.l.b16 %v1185
      %v1295 = vunpack.c.h.b16 %v1185
      %v1296 = vunpack.c.l.b16 %v1186
      %v1297 = vunpack.c.h.b16 %v1186
      %v1298 = vunpack.c.l.b16 %v1187
      %v1299 = vunpack.c.h.b16 %v1187
      %v1300 = vunpack.c.l.b16 %v1188
      %v1301 = vunpack.c.h.b16 %v1188
      %v1302 = vunpack.c.l.b16 %v1189
      %v1303 = vunpack.c.h.b16 %v1189
      %v1304 = vunpack.c.l.b16 %v1190
      %v1305 = vunpack.c.h.b16 %v1190
      %v1306 = vunpack.c.l.b16 %v1191
      %v1307 = vunpack.c.h.b16 %v1191
      %v1308 = vunpack.c.l.b16 %v1192
      %v1309 = vunpack.c.h.b16 %v1192
      %v1310 = vunpack.c.l.b16 %v1193
      %v1311 = vunpack.c.h.b16 %v1193
      %v1312 = vunpack.c.l.b16 %v1194
      %v1313 = vunpack.c.h.b16 %v1194
      %v1314 = vunpack.c.l.b16 %v1195
      %v1315 = vunpack.c.h.b16 %v1195
      %v1316 = vunpack.c.l.b16 %v1196
      %v1317 = vunpack.c.h.b16 %v1196
      %v1318 = vunpack.c.l.b16 %v1197
      %v1319 = vunpack.c.h.b16 %v1197
      %v1320 = vunpack.c.l.b16 %v1198
      %v1321 = vunpack.c.h.b16 %v1198
      %v1322 = vunpack.c.l.b16 %v1199
      %v1323 = vunpack.c.h.b16 %v1199
      %v1324 = vunpack.c.l.b16 %v1200
      %v1325 = vunpack.c.h.b16 %v1200
      %v1326 = vunpack.c.l.b16 %v1201
      %v1327 = vunpack.c.h.b16 %v1201
      %v1328 = vunpack.c.l.b16 %v1202
      %v1329 = vunpack.c.h.b16 %v1202
      %v1330 = vunpack.c.l.b16 %v1203
      %v1331 = vunpack.c.h.b16 %v1203
      %v1332 = vunpack.c.l.b16 %v1204
      %v1333 = vunpack.c.h.b16 %v1204
      %v1334 = vunpack.c.l.b16 %v1205
      %v1335 = vunpack.c.h.b16 %v1205
      %v1336 = vunpack.c.l.b16 %v1206
      %v1337 = vunpack.c.h.b16 %v1206
      %v1338 = vunpack.c.l.b16 %v1207
      %v1339 = vunpack.c.h.b16 %v1207
      %v1340 = vunpack.c.l.b16 %v1208
      %v1341 = vunpack.c.h.b16 %v1208
      %v1342 = vunpack.c.l.b16 %v1209
      %v1343 = vunpack.c.h.b16 %v1209
      %v1344 = vunpack.c.l.b16 %v1210
      %v1345 = vunpack.c.h.b16 %v1210
      %v1346 = vpack.c.b16 %v1284, %v1282
      %v1347 = vpack.c.b16 %v1285, %v1283
      %v1348 = vpack.c.b16 %v1288, %v1286
      %v1349 = vpack.c.b16 %v1289, %v1287
      %v1350 = vpack.c.b16 %v1292, %v1290
      %v1351 = vpack.c.b16 %v1293, %v1291
      %v1352 = vpack.c.b16 %v1296, %v1294
      %v1353 = vpack.c.b16 %v1297, %v1295
      %v1354 = vpack.c.b16 %v1300, %v1298
      %v1355 = vpack.c.b16 %v1301, %v1299
      %v1356 = vpack.c.b16 %v1304, %v1302
      %v1357 = vpack.c.b16 %v1305, %v1303
      %v1358 = vpack.c.b16 %v1308, %v1306
      %v1359 = vpack.c.b16 %v1309, %v1307
      %v1360 = vpack.c.b16 %v1312, %v1310
      %v1361 = vpack.c.b16 %v1313, %v1311
      %v1362 = vpack.c.b16 %v1316, %v1314
      %v1363 = vpack.c.b16 %v1317, %v1315
      %v1364 = vpack.c.b16 %v1320, %v1318
      %v1365 = vpack.c.b16 %v1321, %v1319
      %v1366 = vpack.c.b16 %v1324, %v1322
      %v1367 = vpack.c.b16 %v1325, %v1323
      %v1368 = vpack.c.b16 %v1328, %v1326
      %v1369 = vpack.c.b16 %v1329, %v1327
      %v1370 = vpack.c.b16 %v1332, %v1330
      %v1371 = vpack.c.b16 %v1333, %v1331
      %v1372 = vpack.c.b16 %v1336, %v1334
      %v1373 = vpack.c.b16 %v1337, %v1335
      %v1374 = vpack.c.b16 %v1340, %v1338
      %v1375 = vpack.c.b16 %v1341, %v1339
      %v1376 = vpack.c.b16 %v1344, %v1342
      %v1377 = vpack.c.b16 %v1345, %v1343
      %1410 = vmatpush.bf16.msra.mxu0 %v1360
      %1411 = vmatpush.bf16.msra.mxu0 %v1358
      %1412 = vmatpush.bf16.msra.mxu0 %v1356
      %1413 = vmatpush.bf16.msra.mxu0 %v1354
      %1414 = vmatpush.bf16.msra.mxu0 %v1352
      %1415 = vmatpush.bf16.msra.mxu0 %v1350
      %1416 = vmatpush.bf16.msra.mxu0 %v1348
      %1417 = vmatpush.bf16.msra.mxu0 %v1346
      %1418 = vmatmul.bf16.gmra.mxu0 %v1235
      %v1419 = vpop.f32.mrf.mxu0
      %v1420 = vadd.f32 0.0, %v1419
      %v1421 = vpop.f32.mrf.mxu0
      %v1422 = vadd.f32 0.0, %v1421
      %1423 = vdwg.mxu0
      %1424 = vmatpush.bf16.msra.mxu0 %v1376
      %1425 = vmatpush.bf16.msra.mxu0 %v1374
      %1426 = vmatpush.bf16.msra.mxu0 %v1372
      %1427 = vmatpush.bf16.msra.mxu0 %v1370
      %1428 = vmatpush.bf16.msra.mxu0 %v1368
      %1429 = vmatpush.bf16.msra.mxu0 %v1366
      %1430 = vmatpush.bf16.msra.mxu0 %v1364
      %1431 = vmatpush.bf16.msra.mxu0 %v1362
      %1432 = vmatmul.bf16.gmra.mxu0 %v1247
      %v1433 = vpop.f32.mrf.mxu0
      %v1434 = vadd.f32 %v1420, %v1433
      %v1435 = vpop.f32.mrf.mxu0
      %v1436 = vadd.f32 %v1422, %v1435
      %1437 = vdwg.mxu0
      %1438 = vmatpush.bf16.msra.mxu0 %v1361
      %1439 = vmatpush.bf16.msra.mxu0 %v1359
      %1440 = vmatpush.bf16.msra.mxu0 %v1357
      %1441 = vmatpush.bf16.msra.mxu0 %v1355
      %1442 = vmatpush.bf16.msra.mxu0 %v1353
      %1443 = vmatpush.bf16.msra.mxu0 %v1351
      %1444 = vmatpush.bf16.msra.mxu0 %v1349
      %1445 = vmatpush.bf16.msra.mxu0 %v1347
      %1446 = vmatmul.bf16.gmra.mxu0 %v1235
      %v1447 = vpop.f32.mrf.mxu0
      %v1448 = vadd.f32 0.0, %v1447
      %v1449 = vpop.f32.mrf.mxu0
      %v1450 = vadd.f32 0.0, %v1449
      %1451 = vdwg.mxu0
      %1452 = vmatpush.bf16.msra.mxu0 %v1377
      %1453 = vmatpush.bf16.msra.mxu0 %v1375
      %1454 = vmatpush.bf16.msra.mxu0 %v1373
      %1455 = vmatpush.bf16.msra.mxu0 %v1371
      %1456 = vmatpush.bf16.msra.mxu0 %v1369
      %1457 = vmatpush.bf16.msra.mxu0 %v1367
      %1458 = vmatpush.bf16.msra.mxu0 %v1365
      %1459 = vmatpush.bf16.msra.mxu0 %v1363
      %1460 = vmatmul.bf16.gmra.mxu0 %v1247
      %v1461 = vpop.f32.mrf.mxu0
      %v1462 = vadd.f32 %v1448, %v1461
      %v1463 = vpop.f32.mrf.mxu0
      %v1464 = vadd.f32 %v1450, %v1463
      %1465 = vdwg.mxu0
      %v1500 = vunpack.c.l.b16 %v1145
      %v1501 = vunpack.c.h.b16 %v1145
      %v1502 = vunpack.c.l.b16 %v1146
      %v1503 = vunpack.c.h.b16 %v1146
      %v1504 = vunpack.c.l.b16 %v1147
      %v1505 = vunpack.c.h.b16 %v1147
      %v1506 = vunpack.c.l.b16 %v1148
      %v1507 = vunpack.c.h.b16 %v1148
      %v1508 = vunpack.c.l.b16 %v1149
      %v1509 = vunpack.c.h.b16 %v1149
      %v1510 = vunpack.c.l.b16 %v1150
      %v1511 = vunpack.c.h.b16 %v1150
      %v1512 = vunpack.c.l.b16 %v1151
      %v1513 = vunpack.c.h.b16 %v1151
      %v1514 = vunpack.c.l.b16 %v1152
      %v1515 = vunpack.c.h.b16 %v1152
      %v1516 = vunpack.c.l.b16 %v1153
      %v1517 = vunpack.c.h.b16 %v1153
      %v1518 = vunpack.c.l.b16 %v1154
      %v1519 = vunpack.c.h.b16 %v1154
      %v1520 = vunpack.c.l.b16 %v1155
      %v1521 = vunpack.c.h.b16 %v1155
      %v1522 = vunpack.c.l.b16 %v1156
      %v1523 = vunpack.c.h.b16 %v1156
      %v1524 = vunpack.c.l.b16 %v1157
      %v1525 = vunpack.c.h.b16 %v1157
      %v1526 = vunpack.c.l.b16 %v1158
      %v1527 = vunpack.c.h.b16 %v1158
      %v1528 = vunpack.c.l.b16 %v1159
      %v1529 = vunpack.c.h.b16 %v1159
      %v1530 = vunpack.c.l.b16 %v1160
      %v1531 = vunpack.c.h.b16 %v1160
      %v1532 = vunpack.c.l.b16 %v1161
      %v1533 = vunpack.c.h.b16 %v1161
      %v1534 = vunpack.c.l.b16 %v1162
      %v1535 = vunpack.c.h.b16 %v1162
      %v1536 = vunpack.c.l.b16 %v1163
      %v1537 = vunpack.c.h.b16 %v1163
      %v1538 = vunpack.c.l.b16 %v1164
      %v1539 = vunpack.c.h.b16 %v1164
      %v1540 = vunpack.c.l.b16 %v1165
      %v1541 = vunpack.c.h.b16 %v1165
      %v1542 = vunpack.c.l.b16 %v1166
      %v1543 = vunpack.c.h.b16 %v1166
      %v1544 = vunpack.c.l.b16 %v1167
      %v1545 = vunpack.c.h.b16 %v1167
      %v1546 = vunpack.c.l.b16 %v1168
      %v1547 = vunpack.c.h.b16 %v1168
      %v1548 = vunpack.c.l.b16 %v1169
      %v1549 = vunpack.c.h.b16 %v1169
      %v1550 = vunpack.c.l.b16 %v1170
      %v1551 = vunpack.c.h.b16 %v1170
      %v1552 = vunpack.c.l.b16 %v1171
      %v1553 = vunpack.c.h.b16 %v1171
      %v1554 = vunpack.c.l.b16 %v1172
      %v1555 = vunpack.c.h.b16 %v1172
      %v1556 = vunpack.c.l.b16 %v1173
      %v1557 = vunpack.c.h.b16 %v1173
      %v1558 = vunpack.c.l.b16 %v1174
      %v1559 = vunpack.c.h.b16 %v1174
      %v1560 = vunpack.c.l.b16 %v1175
      %v1561 = vunpack.c.h.b16 %v1175
      %v1562 = vunpack.c.l.b16 %v1176
      %v1563 = vunpack.c.h.b16 %v1176
      %v1564 = vpack.c.b16 %v1502, %v1500
      %v1565 = vpack.c.b16 %v1503, %v1501
      %v1566 = vpack.c.b16 %v1506, %v1504
      %v1567 = vpack.c.b16 %v1507, %v1505
      %v1568 = vpack.c.b16 %v1510, %v1508
      %v1569 = vpack.c.b16 %v1511, %v1509
      %v1570 = vpack.c.b16 %v1514, %v1512
      %v1571 = vpack.c.b16 %v1515, %v1513
      %v1572 = vpack.c.b16 %v1518, %v1516
      %v1573 = vpack.c.b16 %v1519, %v1517
      %v1574 = vpack.c.b16 %v1522, %v1520
      %v1575 = vpack.c.b16 %v1523, %v1521
      %v1576 = vpack.c.b16 %v1526, %v1524
      %v1577 = vpack.c.b16 %v1527, %v1525
      %v1578 = vpack.c.b16 %v1530, %v1528
      %v1579 = vpack.c.b16 %v1531, %v1529
      %v1580 = vpack.c.b16 %v1534, %v1532
      %v1581 = vpack.c.b16 %v1535, %v1533
      %v1582 = vpack.c.b16 %v1538, %v1536
      %v1583 = vpack.c.b16 %v1539, %v1537
      %v1584 = vpack.c.b16 %v1542, %v1540
      %v1585 = vpack.c.b16 %v1543, %v1541
      %v1586 = vpack.c.b16 %v1546, %v1544
      %v1587 = vpack.c.b16 %v1547, %v1545
      %v1588 = vpack.c.b16 %v1550, %v1548
      %v1589 = vpack.c.b16 %v1551, %v1549
      %v1590 = vpack.c.b16 %v1554, %v1552
      %v1591 = vpack.c.b16 %v1555, %v1553
      %v1592 = vpack.c.b16 %v1558, %v1556
      %v1593 = vpack.c.b16 %v1559, %v1557
      %v1594 = vpack.c.b16 %v1562, %v1560
      %v1595 = vpack.c.b16 %v1563, %v1561
      %1628 = vmatpush.bf16.msra.mxu0 %v1578
      %1629 = vmatpush.bf16.msra.mxu0 %v1576
      %1630 = vmatpush.bf16.msra.mxu0 %v1574
      %1631 = vmatpush.bf16.msra.mxu0 %v1572
      %1632 = vmatpush.bf16.msra.mxu0 %v1570
      %1633 = vmatpush.bf16.msra.mxu0 %v1568
      %1634 = vmatpush.bf16.msra.mxu0 %v1566
      %1635 = vmatpush.bf16.msra.mxu0 %v1564
      %1636 = vmatmul.bf16.gmra.mxu0 %v1220
      %v1637 = vpop.f32.mrf.mxu0
      %v1638 = vadd.f32 %v1434, %v1637
      %v1639 = vpop.f32.mrf.mxu0
      %v1640 = vadd.f32 %v1436, %v1639
      %1641 = vdwg.mxu0
      %1642 = vmatpush.bf16.msra.mxu0 %v1594
      %1643 = vmatpush.bf16.msra.mxu0 %v1592
      %1644 = vmatpush.bf16.msra.mxu0 %v1590
      %1645 = vmatpush.bf16.msra.mxu0 %v1588
      %1646 = vmatpush.bf16.msra.mxu0 %v1586
      %1647 = vmatpush.bf16.msra.mxu0 %v1584
      %1648 = vmatpush.bf16.msra.mxu0 %v1582
      %1649 = vmatpush.bf16.msra.mxu0 %v1580
      %1650 = vmatmul.bf16.gmra.mxu0 %v1221
      %v1651 = vpop.f32.mrf.mxu0
      %v1652 = vadd.f32 %v1638, %v1651
      %v1653 = vpop.f32.mrf.mxu0
      %v1654 = vadd.f32 %v1640, %v1653
      %1655 = vdwg.mxu0
      %1656 = vmatpush.bf16.msra.mxu0 %v1579
      %1657 = vmatpush.bf16.msra.mxu0 %v1577
      %1658 = vmatpush.bf16.msra.mxu0 %v1575
      %1659 = vmatpush.bf16.msra.mxu0 %v1573
      %1660 = vmatpush.bf16.msra.mxu0 %v1571
      %1661 = vmatpush.bf16.msra.mxu0 %v1569
      %1662 = vmatpush.bf16.msra.mxu0 %v1567
      %1663 = vmatpush.bf16.msra.mxu0 %v1565
      %1664 = vmatmul.bf16.gmra.mxu0 %v1220
      %v1665 = vpop.f32.mrf.mxu0
      %v1666 = vadd.f32 %v1462, %v1665
      %v1667 = vpop.f32.mrf.mxu0
      %v1668 = vadd.f32 %v1464, %v1667
      %1669 = vdwg.mxu0
      %1670 = vmatpush.bf16.msra.mxu0 %v1595
      %1671 = vmatpush.bf16.msra.mxu0 %v1593
      %1672 = vmatpush.bf16.msra.mxu0 %v1591
      %1673 = vmatpush.bf16.msra.mxu0 %v1589
      %1674 = vmatpush.bf16.msra.mxu0 %v1587
      %1675 = vmatpush.bf16.msra.mxu0 %v1585
      %1676 = vmatpush.bf16.msra.mxu0 %v1583
      %1677 = vmatpush.bf16.msra.mxu0 %v1581
      %1678 = vmatmul.bf16.gmra.mxu0 %v1221
      %v1679 = vpop.f32.mrf.mxu0
      %v1680 = vadd.f32 %v1666, %v1679
      %v1681 = vpop.f32.mrf.mxu0
      %v1682 = vadd.f32 %v1668, %v1681
      %1683 = vdwg.mxu0
      %v1684 = vld [vmem:[#allocation3] sm:$0xee]
      %s1685 = scalar_lea.vmem %s3, 512
      %v1686 = vld [vmem:[%s1685] sm:$0xff]
      %v1687 = vld [vmem:[%s1685 + $0x8] sm:$0xff]
      %v1688 = vld [vmem:[%s1685 + $0x10] sm:$0xff]
      %v1689 = vld [vmem:[%s1685 + $0x18] sm:$0xff]
      %v1690 = vld [vmem:[%s1685 + $0x20] sm:$0xff]
      %v1691 = vld [vmem:[%s1685 + $0x28] sm:$0xff]
      %v1692 = vld [vmem:[%s1685 + $0x30] sm:$0xff]
      %v1693 = vld [vmem:[%s1685 + $0x38] sm:$0xff]
      %v1694 = vld [vmem:[%s1685 + $0x40] sm:$0xff]
      %v1695 = vld [vmem:[%s1685 + $0x48] sm:$0xff]
      %v1696 = vld [vmem:[%s1685 + $0x50] sm:$0xff]
      %v1697 = vld [vmem:[%s1685 + $0x58] sm:$0xff]
      %v1698 = vld [vmem:[%s1685 + $0x60] sm:$0xff]
      %v1699 = vld [vmem:[%s1685 + $0x68] sm:$0xff]
      %v1700 = vld [vmem:[%s1685 + $0x70] sm:$0xff]
      %v1701 = vld [vmem:[%s1685 + $0x78] sm:$0xff]
      %v1702 = vld [vmem:[%s1685 + $0x80] sm:$0xff]
      %v1703 = vld [vmem:[%s1685 + $0x88] sm:$0xff]
      %v1704 = vld [vmem:[%s1685 + $0x90] sm:$0xff]
      %v1705 = vld [vmem:[%s1685 + $0x98] sm:$0xff]
      %v1706 = vld [vmem:[%s1685 + $0xa0] sm:$0xff]
      %v1707 = vld [vmem:[%s1685 + $0xa8] sm:$0xff]
      %v1708 = vld [vmem:[%s1685 + $0xb0] sm:$0xff]
      %v1709 = vld [vmem:[%s1685 + $0xb8] sm:$0xff]
      %v1710 = vld [vmem:[%s1685 + $0xc0] sm:$0xff]
      %v1711 = vld [vmem:[%s1685 + $0xc8] sm:$0xff]
      %v1712 = vld [vmem:[%s1685 + $0xd0] sm:$0xff]
      %v1713 = vld [vmem:[%s1685 + $0xd8] sm:$0xff]
      %v1714 = vld [vmem:[%s1685 + $0xe0] sm:$0xff]
      %v1715 = vld [vmem:[%s1685 + $0xe8] sm:$0xff]
      %v1716 = vld [vmem:[%s1685 + $0xf0] sm:$0xff]
      %v1717 = vld [vmem:[%s1685 + $0xf8] sm:$0xff]
      %v1719 = vunpack.c.l.b16 %v1684
      %v1720 = vunpack.c.h.b16 %v1684
      %v1721 = vpack.c.b16 %v1216, %v1719
      %v1722 = vpack.c.b16 %v1217, %v1720
      %v1723 = vrot.slane %v1721, 1
      %v1724 = vrot.slane %v1222, 1
      %v1725 = vsel %vm865, %v1723, %v1724
      %v1726 = vrot.slane %v1722, 1
      %v1727 = vrot.slane %v1223, 1
      %v1728 = vsel %vm865, %v1726, %v1727
      %v1763 = vunpack.c.l.b16 %v1686
      %v1764 = vunpack.c.h.b16 %v1686
      %v1765 = vunpack.c.l.b16 %v1687
      %v1766 = vunpack.c.h.b16 %v1687
      %v1767 = vunpack.c.l.b16 %v1688
      %v1768 = vunpack.c.h.b16 %v1688
      %v1769 = vunpack.c.l.b16 %v1689
      %v1770 = vunpack.c.h.b16 %v1689
      %v1771 = vunpack.c.l.b16 %v1690
      %v1772 = vunpack.c.h.b16 %v1690
      %v1773 = vunpack.c.l.b16 %v1691
      %v1774 = vunpack.c.h.b16 %v1691
      %v1775 = vunpack.c.l.b16 %v1692
      %v1776 = vunpack.c.h.b16 %v1692
      %v1777 = vunpack.c.l.b16 %v1693
      %v1778 = vunpack.c.h.b16 %v1693
      %v1779 = vunpack.c.l.b16 %v1694
      %v1780 = vunpack.c.h.b16 %v1694
      %v1781 = vunpack.c.l.b16 %v1695
      %v1782 = vunpack.c.h.b16 %v1695
      %v1783 = vunpack.c.l.b16 %v1696
      %v1784 = vunpack.c.h.b16 %v1696
      %v1785 = vunpack.c.l.b16 %v1697
      %v1786 = vunpack.c.h.b16 %v1697
      %v1787 = vunpack.c.l.b16 %v1698
      %v1788 = vunpack.c.h.b16 %v1698
      %v1789 = vunpack.c.l.b16 %v1699
      %v1790 = vunpack.c.h.b16 %v1699
      %v1791 = vunpack.c.l.b16 %v1700
      %v1792 = vunpack.c.h.b16 %v1700
      %v1793 = vunpack.c.l.b16 %v1701
      %v1794 = vunpack.c.h.b16 %v1701
      %v1795 = vunpack.c.l.b16 %v1702
      %v1796 = vunpack.c.h.b16 %v1702
      %v1797 = vunpack.c.l.b16 %v1703
      %v1798 = vunpack.c.h.b16 %v1703
      %v1799 = vunpack.c.l.b16 %v1704
      %v1800 = vunpack.c.h.b16 %v1704
      %v1801 = vunpack.c.l.b16 %v1705
      %v1802 = vunpack.c.h.b16 %v1705
      %v1803 = vunpack.c.l.b16 %v1706
      %v1804 = vunpack.c.h.b16 %v1706
      %v1805 = vunpack.c.l.b16 %v1707
      %v1806 = vunpack.c.h.b16 %v1707
      %v1807 = vunpack.c.l.b16 %v1708
      %v1808 = vunpack.c.h.b16 %v1708
      %v1809 = vunpack.c.l.b16 %v1709
      %v1810 = vunpack.c.h.b16 %v1709
      %v1811 = vunpack.c.l.b16 %v1710
      %v1812 = vunpack.c.h.b16 %v1710
      %v1813 = vunpack.c.l.b16 %v1711
      %v1814 = vunpack.c.h.b16 %v1711
      %v1815 = vunpack.c.l.b16 %v1712
      %v1816 = vunpack.c.h.b16 %v1712
      %v1817 = vunpack.c.l.b16 %v1713
      %v1818 = vunpack.c.h.b16 %v1713
      %v1819 = vunpack.c.l.b16 %v1714
      %v1820 = vunpack.c.h.b16 %v1714
      %v1821 = vunpack.c.l.b16 %v1715
      %v1822 = vunpack.c.h.b16 %v1715
      %v1823 = vunpack.c.l.b16 %v1716
      %v1824 = vunpack.c.h.b16 %v1716
      %v1825 = vunpack.c.l.b16 %v1717
      %v1826 = vunpack.c.h.b16 %v1717
      %v1827 = vpack.c.b16 %v1765, %v1763
      %v1828 = vpack.c.b16 %v1766, %v1764
      %v1829 = vpack.c.b16 %v1769, %v1767
      %v1830 = vpack.c.b16 %v1770, %v1768
      %v1831 = vpack.c.b16 %v1773, %v1771
      %v1832 = vpack.c.b16 %v1774, %v1772
      %v1833 = vpack.c.b16 %v1777, %v1775
      %v1834 = vpack.c.b16 %v1778, %v1776
      %v1835 = vpack.c.b16 %v1781, %v1779
      %v1836 = vpack.c.b16 %v1782, %v1780
      %v1837 = vpack.c.b16 %v1785, %v1783
      %v1838 = vpack.c.b16 %v1786, %v1784
      %v1839 = vpack.c.b16 %v1789, %v1787
      %v1840 = vpack.c.b16 %v1790, %v1788
      %v1841 = vpack.c.b16 %v1793, %v1791
      %v1842 = vpack.c.b16 %v1794, %v1792
      %v1843 = vpack.c.b16 %v1797, %v1795
      %v1844 = vpack.c.b16 %v1798, %v1796
      %v1845 = vpack.c.b16 %v1801, %v1799
      %v1846 = vpack.c.b16 %v1802, %v1800
      %v1847 = vpack.c.b16 %v1805, %v1803
      %v1848 = vpack.c.b16 %v1806, %v1804
      %v1849 = vpack.c.b16 %v1809, %v1807
      %v1850 = vpack.c.b16 %v1810, %v1808
      %v1851 = vpack.c.b16 %v1813, %v1811
      %v1852 = vpack.c.b16 %v1814, %v1812
      %v1853 = vpack.c.b16 %v1817, %v1815
      %v1854 = vpack.c.b16 %v1818, %v1816
      %v1855 = vpack.c.b16 %v1821, %v1819
      %v1856 = vpack.c.b16 %v1822, %v1820
      %v1857 = vpack.c.b16 %v1825, %v1823
      %v1858 = vpack.c.b16 %v1826, %v1824
      %1891 = vmatpush.bf16.msra.mxu0 %v1841
      %1892 = vmatpush.bf16.msra.mxu0 %v1839
      %1893 = vmatpush.bf16.msra.mxu0 %v1837
      %1894 = vmatpush.bf16.msra.mxu0 %v1835
      %1895 = vmatpush.bf16.msra.mxu0 %v1833
      %1896 = vmatpush.bf16.msra.mxu0 %v1831
      %1897 = vmatpush.bf16.msra.mxu0 %v1829
      %1898 = vmatpush.bf16.msra.mxu0 %v1827
      %1899 = vmatmul.bf16.gmra.mxu0 %v1725
      %v1900 = vpop.f32.mrf.mxu0
      %v1901 = vadd.f32 0.0, %v1900
      %v1902 = vpop.f32.mrf.mxu0
      %v1903 = vadd.f32 0.0, %v1902
      %1904 = vdwg.mxu0
      %1905 = vmatpush.bf16.msra.mxu0 %v1857
      %1906 = vmatpush.bf16.msra.mxu0 %v1855
      %1907 = vmatpush.bf16.msra.mxu0 %v1853
      %1908 = vmatpush.bf16.msra.mxu0 %v1851
      %1909 = vmatpush.bf16.msra.mxu0 %v1849
      %1910 = vmatpush.bf16.msra.mxu0 %v1847
      %1911 = vmatpush.bf16.msra.mxu0 %v1845
      %1912 = vmatpush.bf16.msra.mxu0 %v1843
      %1913 = vmatmul.bf16.gmra.mxu0 %v1728
      %v1914 = vpop.f32.mrf.mxu0
      %v1915 = vadd.f32 %v1901, %v1914
      %v1916 = vpop.f32.mrf.mxu0
      %v1917 = vadd.f32 %v1903, %v1916
      %1918 = vdwg.mxu0
      %1919 = vmatpush.bf16.msra.mxu0 %v1842
      %1920 = vmatpush.bf16.msra.mxu0 %v1840
      %1921 = vmatpush.bf16.msra.mxu0 %v1838
      %1922 = vmatpush.bf16.msra.mxu0 %v1836
      %1923 = vmatpush.bf16.msra.mxu0 %v1834
      %1924 = vmatpush.bf16.msra.mxu0 %v1832
      %1925 = vmatpush.bf16.msra.mxu0 %v1830
      %1926 = vmatpush.bf16.msra.mxu0 %v1828
      %1927 = vmatmul.bf16.gmra.mxu0 %v1725
      %v1928 = vpop.f32.mrf.mxu0
      %v1929 = vadd.f32 0.0, %v1928
      %v1930 = vpop.f32.mrf.mxu0
      %v1931 = vadd.f32 0.0, %v1930
      %1932 = vdwg.mxu0
      %1933 = vmatpush.bf16.msra.mxu0 %v1858
      %1934 = vmatpush.bf16.msra.mxu0 %v1856
      %1935 = vmatpush.bf16.msra.mxu0 %v1854
      %1936 = vmatpush.bf16.msra.mxu0 %v1852
      %1937 = vmatpush.bf16.msra.mxu0 %v1850
      %1938 = vmatpush.bf16.msra.mxu0 %v1848
      %1939 = vmatpush.bf16.msra.mxu0 %v1846
      %1940 = vmatpush.bf16.msra.mxu0 %v1844
      %1941 = vmatmul.bf16.gmra.mxu0 %v1728
      %v1942 = vpop.f32.mrf.mxu0
      %v1943 = vadd.f32 %v1929, %v1942
      %v1944 = vpop.f32.mrf.mxu0
      %v1945 = vadd.f32 %v1931, %v1944
      %1946 = vdwg.mxu0
      %v1947 = vadd.f32 %v1652, %v1915
      %v1948 = vadd.f32 %v1680, %v1943
      %v1949 = vadd.f32 %v1654, %v1917
      %v1950 = vadd.f32 %v1682, %v1945
      %v1951 = vld [vmem:[%s4] sm:$0x3]
      %v1953 = vperm.slane %v1951, 0
      %v1954 = vperm.slane %v1951, 1
      %v1957 = vadd.f32 %v1947, %v1953
      %v1958 = vadd.f32 %v1948, %v1954
      %v1959 = vadd.f32 %v1949, %v1953
      %v1960 = vadd.f32 %v1950, %v1954
      %v1961 = vld [vmem:[%s219] sm:$0xff]
      %v1962 = vld [vmem:[%s219 + $0x8] sm:$0xff]
      %v1963 = vld [vmem:[%s219 + $0x10] sm:$0xff]
      %v1964 = vld [vmem:[%s219 + $0x18] sm:$0xff]
      %v1965 = vadd.f32 %v1957, %v1961
      %v1966 = vadd.f32 %v1958, %v1962
      %v1967 = vadd.f32 %v1959, %v1963
      %v1968 = vadd.f32 %v1960, %v1964
      %v1969 = vmax.f32 %v1965, 0.0
      %v1970 = vmax.f32 %v1966, 0.0
      %v1971 = vmax.f32 %v1967, 0.0
      %v1972 = vmax.f32 %v1968, 0.0
      %1973 = vst [vmem:[%s224] sm:$0xff] %v1969
      %1974 = vst [vmem:[%s224 + $0x8] sm:$0xff] %v1970
      %1975 = vst [vmem:[%s224 + $0x10] sm:$0xff] %v1971
      %1976 = vst [vmem:[%s224 + $0x18] sm:$0xff] %v1972
      %p1977 = scmp.lt.s32.totalorder %s16, 1
      %s1978 = scalar_select %p1977, %s16, 1
      %s1979 = smul.addr %s1978, 4
      %s1980 = smul.addr %s1979, 8
      %s1981 = scalar_lea.vmem %s5, %s1980
      // Predicated region
      $region41: #{basic_block_pallas.1} parent=39 // pred_check
        %p1982 = pneg %p144
      $region42: #{basic_block_pallas.1} parent=39 // pred_check_branch
        %1984 = sbr.rel (%p1982) target = $region44
      $region43: #{basic_block_pallas.1} parent=39 // pred_region
        _
      $region44: #{basic_block_pallas.1} parent=39 // pred_fallthru
        _
    $region40: #{basic_block_pallas.1} parent=5 // pred_fallthru
      _
    %p1985 = scmp.le.s32.totalorder 2, %s11
    // Predicated region
    $region45: #{basic_block_pallas.1} parent=5 // pred_check
      %p1986 = pneg %p1985
    $region46: #{basic_block_pallas.1} parent=5 // pred_check_branch
      %1988 = sbr.rel (%p1986) target = $region48
    $region47: #{basic_block_pallas.1} parent=5 // pred_region
      %s1989 = ssub.s32 %s11, 2
      // Predicated region
      $region49: #{basic_block_pallas.1} parent=47 // pred_check
        %p1990 = pneg %p150
      $region50: #{basic_block_pallas.1} parent=47 // pred_check_branch
        %1992 = sbr.rel (%p1990) target = $region52
      $region51: #{basic_block_pallas.1} parent=47 // pred_region
        %p1993 = scmp.lt.s32.totalorder %s17, 1
        %s1994 = scalar_select %p1993, %s17, 1
        %s1995 = smul.addr %s1994, 4
        %s1996 = smul.addr %s1995, 8
        %s1997 = scalar_lea.vmem %s5, %s1996
      $region52: #{basic_block_pallas.1} parent=47 // pred_fallthru
        _
    $region48: #{basic_block_pallas.1} parent=5 // pred_fallthru
      _
  $region6: #{basic_block_pallas.1} parent=0 // loop_footer
    %s15 = sadd.s32 1, %s11
  $region7: #{basic_block_pallas.1} parent=0 // loop_footer_branch
    %10 = sbr.rel target = $region3
  $region8: #{basic_block_pallas.1} parent=0 // loop_exit
    _

</llo_original>
